<compile_context>
chip_gen: v6e
topology: v6e:2x2x1
jax: 0.10.0
libtpu: 0.0.40
codegen_flags: <defaults>
</compile_context>

<pallas_src>
import numpy as np
import jax
import jax.numpy as jnp
from jax.experimental import pallas as pl
from jax.experimental.pallas import tpu as pltpu

# ----------------------------- model constants -----------------------------
D = 32                      # embedding dim (stands in for SAM's 256)
PATCH = 4                   # patch-embed "conv" stride
HID = 64                    # encoder / decoder MLP hidden
DUP = 8                     # upscaled mask-feature channels
NUM_MASK_TOKENS = 4
NUM_OUT_TOKENS = 1 + NUM_MASK_TOKENS
PE_F = D // 2               # random-fourier features per sin/cos half
UPSCALE = 4                 # spatial upscale of mask features
LANES = 128

PIXEL_MEAN = np.array([123.675, 116.28, 103.53], np.float32)
PIXEL_STD = np.array([58.395, 57.12, 57.375], np.float32)


def _round_up(x, m):
    return (x + m - 1) // m * m


class _SlabPacker:
    """Packs many tiny [r, c<=128] constants into one lane-padded slab so the
    kernel sees ONE DMA descriptor instead of ~30 (perf review item #2)."""

    def __init__(self, dtype, row_align):
        self.dtype = dtype
        self.row_align = row_align
        self.entries = []          # (array, row0)
        self.offsets = {}          # name -> (row0, rows, cols)
        self.rows = 0

    def add(self, name, arr):
        arr = jnp.asarray(arr, jnp.float32)
        if arr.ndim == 1:
            arr = arr.reshape(1, -1)
        r, c = arr.shape
        assert c <= LANES, (name, arr.shape)
        self.offsets[name] = (self.rows, r, c)
        self.entries.append((arr, self.rows))
        self.rows += _round_up(r, self.row_align)

    def finalize(self):
        total = _round_up(max(self.rows, self.row_align), self.row_align)
        slab = jnp.zeros((total, LANES), jnp.float32)
        for arr, row0 in self.entries:
            r, c = arr.shape
            slab = slab.at[row0:row0 + r, :c].set(arr)
        return slab.astype(self.dtype)


# ------------------------------- fused kernel -------------------------------
def _make_fused_kernel(woff, boff):
    f32 = jnp.float32
    bf16 = jnp.bfloat16

    def kernel(patch_ref, coords_ref, labels_ref, wslab_ref, bslab_ref,
               mask_ref, score_ref):

        def W(name):                                   # bf16 MXU operand slab
            r0, r, c = woff[name]
            return wslab_ref[r0:r0 + r, 0:c]

        def B(name):                                   # f32 bias/constant slab
            r0, r, c = boff[name]
            return bslab_ref[r0:r0 + r, 0:c]

        def mm(a, b):
            # bf16 inputs to the MXU, f32 accumulation (v6e/v7x 2x256^2 bf16).
            return jnp.dot(a.astype(bf16), b.astype(bf16),
                           preferred_element_type=f32)

        # ---------- encoder: patch embed (mean/std folded in) + residual MLP
        # TODO(synk): full multi-stage EfficientViT backbone reduced to this.
        # TODO(synk): exact (erf) GELU would match PyTorch default; tanh approx
        # kept for a guaranteed Mosaic lowering.
        e = mm(patch_ref[...], W("patch_w")) + B("patch_b")               # [S, D]
        henc = jax.nn.gelu(mm(e, W("enc_w1")) + B("enc_b1"), approximate=True)
        emb = e + mm(henc, W("enc_w2")) + B("enc_b2")                     # [S, D]

        # ---------- prompt encoder: random-fourier PE via sin-phase trick
        proj = mm(coords_ref[...], W("gauss"))                            # [P, D]
        pe = jnp.sin(2.0 * np.pi * proj + B("phase"))
        lab = labels_ref[...]                                             # [P, 1]
        point_emb = pe + jnp.where(lab == 0.0, B("bg_embed"), B("fg_embed"))
        sparse = jnp.where(lab == -1.0, B("not_a_point"), point_emb)      # [P, D]

        # token assembly (iou + mask tokens + prompts) as a scatter matmul
        tokens = B("tok_base") + mm(W("scatter"), sparse)                 # [T, D]

        # ---------- cross-attention tokens -> image (single block)
        # TODO(synk): SAM's multi-head two-way transformer reduced to one block.
        # Wq/Wo are zero-padded to 2D so the fused [K|V] tile is never lane-
        # sliced.  TODO(synk): at real D=256 drop the padding and statically
        # slice kv at the 128-lane boundary instead (padding doubles MXU work).
        q = mm(tokens, W("wq_pad")) + B("bq_pad")                         # [T, 2D]
        kv = mm(emb, W("w_kv")) + B("kv_bias")                            # [S, 2D]
        s = jax.lax.dot_general(q.astype(bf16), kv.astype(bf16),
                                (((1,), (1,)), ((), ())),
                                preferred_element_type=f32) * (1.0 / np.sqrt(D))
        s = s - jnp.max(s, axis=-1, keepdims=True)
        p = jnp.exp(s)
        p = p * pl.reciprocal(jnp.sum(p, axis=-1, keepdims=True), approx=True)
        attn = mm(p, kv)                                                  # [T, 2D]
        tokens = tokens + mm(attn, W("wo_pad")) + B("bo")
        hdec = jax.nn.gelu(mm(tokens, W("dec_w1")) + B("dec_b1"), approximate=True)
        tokens = tokens + mm(hdec, W("dec_w2")) + B("dec_b2")

        iou_tok = tokens[0:1, :]                                          # [1, D]
        mask_toks = tokens[1:1 + NUM_MASK_TOKENS, :]                      # [4, D]

        # ---------- hypernetwork + LOW-RES mask features
        hyper_in = mm(mask_toks, W("hyper_w")) + B("hyper_b")             # [4, DUP]
        src_up = mm(emb, W("up_w")) + B("up_bias")                        # [S, DUP]

        # ---------- IoU head + mask selection (argmax via iota/min, one-hot)
        ih = jax.nn.gelu(mm(iou_tok, W("iou_w1")) + B("iou_b1"), approximate=True)
        iou_pred = mm(ih, W("iou_w2")) + B("iou_b2")                      # [1, 4]
        score = iou_pred + B("reweight")
        idx = jax.lax.broadcasted_iota(jnp.int32, score.shape, 1).astype(f32)
        mx = jnp.max(score, axis=-1, keepdims=True)
        best = jnp.min(jnp.where(score == mx, idx, float(NUM_MASK_TOKENS)),
                       axis=-1, keepdims=True)
        onehot = (idx == best).astype(f32)                                # [1, 4]

        hyper_sel = mm(onehot, hyper_in)                                  # [1, DUP]
        mask_low = jax.lax.dot_general(hyper_sel.astype(bf16), src_up.astype(bf16),
                                       (((1,), (1,)), ((), ())),
                                       preferred_element_type=f32)        # [1, S]
        # PostProcess >0 threshold fused here; it commutes with the nearest
        # upsample done (as pure layout) in the wrapper.
        # TODO(synk): at real Hm*Wm, emit the mask directly as a lane-dense
        # uint8 block from the kernel to cut writeback bytes 4x.
        mask_ref[...] = jnp.where(mask_low > 0.0, 255.0, 0.0)
        score_ref[...] = jnp.sum(onehot * iou_pred, axis=-1, keepdims=True)

    return kernel


# -------------------------- build (hoisted constants) --------------------------
def build_export_efficient_sam(params, H, W, num_points):
    """Everything here depends only on params / static shapes; computed once."""
    f32 = jnp.float32
    h, w = H // PATCH, W // PATCH
    S = h * w
    P = num_points + 1                       # +1 padding point
    T = NUM_OUT_TOKENS + P

    # PreProcess (x - mean)/std folded into the patch-embed "conv" weights.
    inv_std = jnp.repeat(1.0 / jnp.asarray(PIXEL_STD, f32), PATCH * PATCH)
    mean = jnp.repeat(jnp.asarray(PIXEL_MEAN, f32), PATCH * PATCH)
    patch_w_eff = params["patch_w"] * inv_std[:, None]
    patch_b_eff = params["patch_b"] - (mean * inv_std) @ params["patch_w"]

    # Random-fourier PE: duplicated gauss columns + phase -> no in-kernel concat.
    gauss = params["pe_gauss"]
    gauss_dup = jnp.concatenate([gauss, gauss], axis=1)                   # [2, D]
    phase = jnp.concatenate([jnp.zeros((PE_F,), f32),
                             jnp.full((PE_F,), np.pi / 2.0, f32)])

    # Dense PE for the image grid (sequence-major, D on lanes).
    ys = (jnp.arange(h, dtype=f32) + 0.5) / h
    xs = (jnp.arange(w, dtype=f32) + 0.5) / w
    gy, gx = jnp.meshgrid(ys, xs, indexing="ij")
    grid_coords = jnp.stack([gx, gy], axis=-1).reshape(S, 2)
    pe_seq = jnp.sin(2.0 * np.pi * ((2.0 * grid_coords - 1.0) @ gauss_dup) + phase[None, :])

    # Attention: fused [K|V]; dense PE + no-mask dense embedding folded into the
    # kv bias; Wq/Wo zero-padded to 2D (toy D=32 only; see kernel TODO).
    no_mask = params["no_mask_embed"].reshape(1, D)
    zero_dd = jnp.zeros((D, D), f32)
    wq_pad = jnp.concatenate([params["wq"], zero_dd], axis=1)
    bq_pad = jnp.concatenate([params["bq"], jnp.zeros((D,), f32)])
    w_kv = jnp.concatenate([params["wk"], params["wv"]], axis=1)
    k_bias = (pe_seq + no_mask) @ params["wk"] + params["bk"][None, :]
    v_bias = jnp.broadcast_to(no_mask @ params["wv"] + params["bv"][None, :], (S, D))
    kv_bias = jnp.concatenate([k_bias, v_bias], axis=1)                   # [S, 2D]
    wo_pad = jnp.concatenate([zero_dd, params["wo"]], axis=0)

    # Output tokens zero-padded to T rows + scatter matrix for the prompts.
    out_tokens = jnp.concatenate([params["iou_token"], params["mask_tokens"]], axis=0)
    tok_base = jnp.concatenate([out_tokens, jnp.zeros((P, D), f32)], axis=0)
    scat = np.zeros((T, P), np.float32)
    scat[NUM_OUT_TOKENS:, :] = np.eye(P, dtype=np.float32)

    up_bias = no_mask @ params["up_w"] + params["up_b"][None, :]

    rw = np.zeros((1, NUM_MASK_TOKENS), np.float32)
    rw[0, 0] = (num_points - 2.5) * 1000.0

    # ---- pack into two lane-padded slabs -----------------------------------
    wp = _SlabPacker(jnp.bfloat16, row_align=16)       # MXU operands, bf16
    wp.add("patch_w", patch_w_eff)
    wp.add("enc_w1", params["enc_w1"])
    wp.add("enc_w2", params["enc_w2"])
    wp.add("gauss", gauss_dup)
    wp.add("scatter", scat)
    wp.add("wq_pad", wq_pad)
    wp.add("w_kv", w_kv)
    wp.add("wo_pad", wo_pad)
    wp.add("dec_w1", params["dec_w1"])
    wp.add("dec_w2", params["dec_w2"])
    wp.add("hyper_w", params["hyper_w"])
    wp.add("up_w", params["up_w"])
    wp.add("iou_w1", params["iou_w1"])
    wp.add("iou_w2", params["iou_w2"])

    bp = _SlabPacker(jnp.float32, row_align=8)         # biases / constants, f32
    bp.add("patch_b", patch_b_eff)
    bp.add("enc_b1", params["enc_b1"])
    bp.add("enc_b2", params["enc_b2"])
    bp.add("phase", phase)
    bp.add("not_a_point", params["not_a_point"])
    bp.add("bg_embed", params["bg_embed"])
    bp.add("fg_embed", params["fg_embed"])
    bp.add("tok_base", tok_base)
    bp.add("bq_pad", bq_pad)
    bp.add("kv_bias", kv_bias)
    bp.add("bo", params["bo"])
    bp.add("dec_b1", params["dec_b1"])
    bp.add("dec_b2", params["dec_b2"])
    bp.add("hyper_b", params["hyper_b"])
    bp.add("up_bias", up_bias)
    bp.add("iou_b1", params["iou_b1"])
    bp.add("iou_b2", params["iou_b2"])
    bp.add("reweight", rw)

    wslab = wp.finalize()
    bslab = bp.finalize()

    kernel = _make_fused_kernel(wp.offsets, bp.offsets)

    def full_spec(shape):
        return pl.BlockSpec(shape, lambda i: (0,) * len(shape))

    in_shapes = [(S, 3 * PATCH * PATCH), (P, 2), (P, 1), wslab.shape, bslab.shape]
    fused = pl.pallas_call(
        kernel,
        grid=(1,),
        out_shape=(jax.ShapeDtypeStruct((1, S), jnp.float32),
                   jax.ShapeDtypeStruct((1, 1), jnp.float32)),
        in_specs=[full_spec(s) for s in in_shapes],
        out_specs=(full_spec((1, S)), full_spec((1, 1))),
        compiler_params=pltpu.CompilerParams(
            dimension_semantics=("arbitrary",),
            vmem_limit_bytes=32 * 1024 * 1024),
    )
    # TODO(synk): at real SAM resolution, add an S-tiled grid axis with
    # dimension_semantics=("parallel", ...) so the encoder shards across v7x's
    # two TensorCores while staying under its 64 MiB VMEM.

    def forward(image, point_coords, point_labels, org_img_shape):
        # include_batch_axis=False -> implicit batch of 1 throughout.
        # PreProcess layout + patch extraction (normalization folded into weights).
        # TODO(synk): at 1024x1024 do this inside the kernel via an h-tiled
        # index_map so XLA never materializes the f32 patch tensor.
        patches = image.astype(jnp.float32).reshape(h, PATCH, w, PATCH, 3)
        patches = jnp.transpose(patches, (0, 2, 4, 1, 3)).reshape(S, 3 * PATCH * PATCH)

        # Point prompt prep: pad with (0,0)/-1, +0.5, normalize x by W and y by H.
        pad_pt = jnp.zeros((1, 2), point_coords.dtype)
        pad_lb = -jnp.ones((1,), point_labels.dtype)
        coords = jnp.concatenate([point_coords, pad_pt], axis=0) + 0.5
        labels = jnp.concatenate([point_labels, pad_lb], axis=0)
        coords_m11 = (2.0 * (coords / jnp.array([[W, H]], jnp.float32)) - 1.0).astype(jnp.float32)
        labels_col = labels.reshape(P, 1).astype(jnp.float32)

        mask_low, score = fused(patches, coords_m11, labels_col, wslab, bslab)

        # PostProcess: nearest 4x upsample is pure replication (layout only) and
        # commutes with the >0 -> 255 threshold already applied in-kernel.
        Hm, Wm = h * UPSCALE, w * UPSCALE
        mask2d = mask_low.reshape(h, w)
        mask_up = jnp.broadcast_to(mask2d[:, None, :, None],
                                   (h, UPSCALE, w, UPSCALE)).reshape(Hm, Wm)
        mask_u8 = mask_up.astype(jnp.uint8)[None, :, :, None]
        mask_4ch = jnp.broadcast_to(mask_u8, (1, Hm, Wm, 3))              # NHWC uint8
        return mask_4ch, score

    return forward


# ------------------------------- parameter init ------------------------------
def init_params(key):
    names_shapes = {
        "patch_w": (3 * PATCH * PATCH, D), "patch_b": (D,),
        "enc_w1": (D, HID), "enc_b1": (HID,),
        "enc_w2": (HID, D), "enc_b2": (D,),
        "pe_gauss": (2, PE_F),
        "not_a_point": (D,), "bg_embed": (D,), "fg_embed": (D,),
        "no_mask_embed": (D,),
        "wq": (D, D), "bq": (D,), "wk": (D, D), "bk": (D,),
        "wv": (D, D), "bv": (D,), "wo": (D, D), "bo": (D,),
        "dec_w1": (D, HID), "dec_b1": (HID,),
        "dec_w2": (HID, D), "dec_b2": (D,),
        "hyper_w": (D, DUP), "hyper_b": (DUP,),
        "up_w": (D, DUP), "up_b": (DUP,),
        "iou_w1": (D, D), "iou_b1": (D,),
        "iou_w2": (D, NUM_MASK_TOKENS), "iou_b2": (NUM_MASK_TOKENS,),
        "iou_token": (1, D), "mask_tokens": (NUM_MASK_TOKENS, D),
    }
    keys = jax.random.split(key, len(names_shapes))
    params = {}
    for k, (name, shape) in zip(keys, sorted(names_shapes.items())):
        scale = 1.0 if name == "pe_gauss" else 0.05
        params[name] = scale * jax.random.normal(k, shape, jnp.float32)
    return params


# ------------------------------------ main -----------------------------------
if __name__ == "__main__":
    root = jax.random.PRNGKey(0)
    pkey, k_img, k_pts = jax.random.split(root, 3)
    params = init_params(pkey)

    H = W = 16
    N_PTS = 2
    image = jax.random.uniform(k_img, (H, W, 3), jnp.float32, 0.0, 255.0)
    point_coords = jax.random.uniform(k_pts, (N_PTS, 2), jnp.float32, 0.0, float(H))
    point_labels = jnp.array([1.0, 0.0], jnp.float32)
    org_img_shape = jnp.array([H, W], jnp.int32)

    # Input-independent constants computed & packed once.
    forward = build_export_efficient_sam(params, H, W, N_PTS)
    fwd = jax.jit(forward)

    mask_4ch, score = fwd(image, point_coords, point_labels, org_img_shape)
    jax.block_until_ready((mask_4ch, score))

    assert mask_4ch.shape == (1, H, W, 3), mask_4ch.shape
    assert mask_4ch.dtype == jnp.uint8
    assert score.shape == (1, 1), score.shape
    print("KERNEL_OK")
</pallas_src>

<mosaic_0001>
module attributes {stable_mosaic.version = 11 : i64} {
  func.func @kernel(%arg0: i32, %arg1: memref<16x48xf32, #tpu.memory_space<vmem>>, %arg2: memref<3x2xf32, #tpu.memory_space<vmem>>, %arg3: memref<3x1xf32, #tpu.memory_space<vmem>>, %arg4: memref<528x128xbf16, #tpu.memory_space<vmem>>, %arg5: memref<152x128xf32, #tpu.memory_space<vmem>>, %arg6: memref<1x16xf32, #tpu.memory_space<vmem>>, %arg7: memref<1x1xf32, #tpu.memory_space<vmem>>) attributes {dimension_semantics = [#tpu.dimension_semantics<arbitrary>], iteration_bounds = array<i64: 1>, scalar_prefetch = 0 : i64, scratch_operands = 0 : i64, tpu.core_type = #tpu.core_type<tc>, window_params = [{pipeline_mode = #tpu.pipeline_mode<synchronous>, transform_indices = @transform_0, window_bounds = array<i64: 16, 48>}, {pipeline_mode = #tpu.pipeline_mode<synchronous>, transform_indices = @transform_1, window_bounds = array<i64: 3, 2>}, {pipeline_mode = #tpu.pipeline_mode<synchronous>, transform_indices = @transform_2, window_bounds = array<i64: 3, 1>}, {pipeline_mode = #tpu.pipeline_mode<synchronous>, transform_indices = @transform_3, window_bounds = array<i64: 528, 128>}, {pipeline_mode = #tpu.pipeline_mode<synchronous>, transform_indices = @transform_4, window_bounds = array<i64: 152, 128>}, {pipeline_mode = #tpu.pipeline_mode<synchronous>, transform_indices = @transform_5, window_bounds = array<i64: 1, 16>}, {pipeline_mode = #tpu.pipeline_mode<synchronous>, transform_indices = @transform_6, window_bounds = array<i64: 1, 1>}]} {
    %c0 = arith.constant 0 : index
    %c0_0 = arith.constant 0 : index
    %0 = vector.load %arg1[%c0, %c0_0] : memref<16x48xf32, #tpu.memory_space<vmem>>, vector<16x48xf32>
    %c0_1 = arith.constant 0 : index
    %c0_2 = arith.constant 0 : index
    %1 = vector.load %arg4[%c0_1, %c0_2] : memref<528x128xbf16, #tpu.memory_space<vmem>>, vector<48x32xbf16>
    %2 = arith.truncf %0 : vector<16x48xf32> to vector<16x48xbf16>
    %cst = arith.constant dense<0.000000e+00> : vector<16x32xf32>
    %3 = tpu.matmul %2, %1, %cst {dimension_numbers = #tpu.dot_dimension_numbers<[1], [0], [0], [1], [0, 0, 1, 1], [], []>} : vector<16x48xbf16>, vector<48x32xbf16>, vector<16x32xf32> -> vector<16x32xf32>
    %c0_3 = arith.constant 0 : index
    %c0_4 = arith.constant 0 : index
    %4 = vector.load %arg5[%c0_3, %c0_4] : memref<152x128xf32, #tpu.memory_space<vmem>>, vector<1x32xf32>
    %5 = vector.broadcast %4 : vector<1x32xf32> to vector<16x32xf32>
    %6 = arith.addf %3, %5 : vector<16x32xf32>
    %c48 = arith.constant 48 : index
    %c0_5 = arith.constant 0 : index
    %7 = vector.load %arg4[%c48, %c0_5] : memref<528x128xbf16, #tpu.memory_space<vmem>>, vector<32x64xbf16>
    %8 = arith.truncf %6 : vector<16x32xf32> to vector<16x32xbf16>
    %cst_6 = arith.constant dense<0.000000e+00> : vector<16x64xf32>
    %9 = tpu.matmul %8, %7, %cst_6 {dimension_numbers = #tpu.dot_dimension_numbers<[1], [0], [0], [1], [0, 0, 1, 1], [], []>} : vector<16x32xbf16>, vector<32x64xbf16>, vector<16x64xf32> -> vector<16x64xf32>
    %c8 = arith.constant 8 : index
    %c0_7 = arith.constant 0 : index
    %10 = vector.load %arg5[%c8, %c0_7] : memref<152x128xf32, #tpu.memory_space<vmem>>, vector<1x64xf32>
    %11 = vector.broadcast %10 : vector<1x64xf32> to vector<16x64xf32>
    %12 = arith.addf %9, %11 : vector<16x64xf32>
    %13 = arith.mulf %12, %12 : vector<16x64xf32>
    %14 = arith.mulf %12, %13 : vector<16x64xf32>
    %cst_8 = arith.constant 4.471500e-02 : f32
    %15 = vector.broadcast %cst_8 : f32 to vector<16x64xf32>
    %16 = arith.mulf %15, %14 : vector<16x64xf32>
    %17 = arith.addf %12, %16 : vector<16x64xf32>
    %cst_9 = arith.constant 0.797884583 : f32
    %18 = vector.broadcast %cst_9 : f32 to vector<16x64xf32>
    %19 = arith.mulf %18, %17 : vector<16x64xf32>
    %20 = math.tanh %19 : vector<16x64xf32>
    %cst_10 = arith.constant 1.000000e+00 : f32
    %21 = vector.broadcast %cst_10 : f32 to vector<16x64xf32>
    %22 = arith.addf %21, %20 : vector<16x64xf32>
    %cst_11 = arith.constant 5.000000e-01 : f32
    %23 = vector.broadcast %cst_11 : f32 to vector<16x64xf32>
    %24 = arith.mulf %23, %22 : vector<16x64xf32>
    %25 = arith.mulf %12, %24 : vector<16x64xf32>
    %c80 = arith.constant 80 : index
    %c0_12 = arith.constant 0 : index
    %26 = vector.load %arg4[%c80, %c0_12] : memref<528x128xbf16, #tpu.memory_space<vmem>>, vector<64x32xbf16>
    %27 = arith.truncf %25 : vector<16x64xf32> to vector<16x64xbf16>
    %cst_13 = arith.constant dense<0.000000e+00> : vector<16x32xf32>
    %28 = tpu.matmul %27, %26, %cst_13 {dimension_numbers = #tpu.dot_dimension_numbers<[1], [0], [0], [1], [0, 0, 1, 1], [], []>} : vector<16x64xbf16>, vector<64x32xbf16>, vector<16x32xf32> -> vector<16x32xf32>
    %29 = arith.addf %6, %28 : vector<16x32xf32>
    %c16 = arith.constant 16 : index
    %c0_14 = arith.constant 0 : index
    %30 = vector.load %arg5[%c16, %c0_14] : memref<152x128xf32, #tpu.memory_space<vmem>>, vector<1x32xf32>
    %31 = vector.broadcast %30 : vector<1x32xf32> to vector<16x32xf32>
    %32 = arith.addf %29, %31 : vector<16x32xf32>
    %c0_15 = arith.constant 0 : index
    %c0_16 = arith.constant 0 : index
    %33 = vector.load %arg2[%c0_15, %c0_16] : memref<3x2xf32, #tpu.memory_space<vmem>>, vector<3x2xf32>
    %c144 = arith.constant 144 : index
    %c0_17 = arith.constant 0 : index
    %34 = vector.load %arg4[%c144, %c0_17] : memref<528x128xbf16, #tpu.memory_space<vmem>>, vector<2x32xbf16>
    %35 = arith.truncf %33 : vector<3x2xf32> to vector<3x2xbf16>
    %cst_18 = arith.constant dense<0.000000e+00> : vector<3x32xf32>
    %36 = tpu.matmul %35, %34, %cst_18 {dimension_numbers = #tpu.dot_dimension_numbers<[1], [0], [0], [1], [0, 0, 1, 1], [], []>} : vector<3x2xbf16>, vector<2x32xbf16>, vector<3x32xf32> -> vector<3x32xf32>
    %cst_19 = arith.constant 6.28318548 : f32
    %37 = vector.broadcast %cst_19 : f32 to vector<3x32xf32>
    %38 = arith.mulf %37, %36 : vector<3x32xf32>
    %c24 = arith.constant 24 : index
    %c0_20 = arith.constant 0 : index
    %39 = vector.load %arg5[%c24, %c0_20] : memref<152x128xf32, #tpu.memory_space<vmem>>, vector<1x32xf32>
    %40 = vector.broadcast %39 : vector<1x32xf32> to vector<3x32xf32>
    %41 = arith.addf %38, %40 : vector<3x32xf32>
    %42 = math.sin %41 : vector<3x32xf32>
    %c0_21 = arith.constant 0 : index
    %c0_22 = arith.constant 0 : index
    %43 = vector.load %arg3[%c0_21, %c0_22] : memref<3x1xf32, #tpu.memory_space<vmem>>, vector<3x1xf32>
    %cst_23 = arith.constant 0.000000e+00 : f32
    %44 = vector.broadcast %cst_23 : f32 to vector<3x1xf32>
    %45 = arith.cmpf oeq, %43, %44 : vector<3x1xf32>
    %c40 = arith.constant 40 : index
    %c0_24 = arith.constant 0 : index
    %46 = vector.load %arg5[%c40, %c0_24] : memref<152x128xf32, #tpu.memory_space<vmem>>, vector<1x32xf32>
    %c48_25 = arith.constant 48 : index
    %c0_26 = arith.constant 0 : index
    %47 = vector.load %arg5[%c48_25, %c0_26] : memref<152x128xf32, #tpu.memory_space<vmem>>, vector<1x32xf32>
    %48 = vector.shape_cast %45 : vector<3x1xi1> to vector<3x1xi1>
    %49 = vector.broadcast %48 : vector<3x1xi1> to vector<3x32xi1>
    %50 = vector.shape_cast %46 : vector<1x32xf32> to vector<1x32xf32>
    %51 = vector.broadcast %50 : vector<1x32xf32> to vector<3x32xf32>
    %52 = vector.shape_cast %47 : vector<1x32xf32> to vector<1x32xf32>
    %53 = vector.broadcast %52 : vector<1x32xf32> to vector<3x32xf32>
    %54 = arith.select %49, %51, %53 : vector<3x32xi1>, vector<3x32xf32>
    %55 = arith.addf %42, %54 : vector<3x32xf32>
    %cst_27 = arith.constant -1.000000e+00 : f32
    %56 = vector.broadcast %cst_27 : f32 to vector<3x1xf32>
    %57 = arith.cmpf oeq, %43, %56 : vector<3x1xf32>
    %c32 = arith.constant 32 : index
    %c0_28 = arith.constant 0 : index
    %58 = vector.load %arg5[%c32, %c0_28] : memref<152x128xf32, #tpu.memory_space<vmem>>, vector<1x32xf32>
    %59 = vector.shape_cast %57 : vector<3x1xi1> to vector<3x1xi1>
    %60 = vector.broadcast %59 : vector<3x1xi1> to vector<3x32xi1>
    %61 = vector.shape_cast %58 : vector<1x32xf32> to vector<1x32xf32>
    %62 = vector.broadcast %61 : vector<1x32xf32> to vector<3x32xf32>
    %63 = arith.select %60, %62, %55 : vector<3x32xi1>, vector<3x32xf32>
    %c56 = arith.constant 56 : index
    %c0_29 = arith.constant 0 : index
    %64 = vector.load %arg5[%c56, %c0_29] : memref<152x128xf32, #tpu.memory_space<vmem>>, vector<8x32xf32>
    %c160 = arith.constant 160 : index
    %c0_30 = arith.constant 0 : index
    %65 = vector.load %arg4[%c160, %c0_30] : memref<528x128xbf16, #tpu.memory_space<vmem>>, vector<8x3xbf16>
    %66 = arith.truncf %63 : vector<3x32xf32> to vector<3x32xbf16>
    %cst_31 = arith.constant dense<0.000000e+00> : vector<8x32xf32>
    %67 = tpu.matmul %65, %66, %cst_31 {dimension_numbers = #tpu.dot_dimension_numbers<[1], [0], [0], [1], [0, 0, 1, 1], [], []>} : vector<8x3xbf16>, vector<3x32xbf16>, vector<8x32xf32> -> vector<8x32xf32>
    %68 = arith.addf %64, %67 : vector<8x32xf32>
    %c176 = arith.constant 176 : index
    %c0_32 = arith.constant 0 : index
    %69 = vector.load %arg4[%c176, %c0_32] : memref<528x128xbf16, #tpu.memory_space<vmem>>, vector<32x64xbf16>
    %70 = arith.truncf %68 : vector<8x32xf32> to vector<8x32xbf16>
    %cst_33 = arith.constant dense<0.000000e+00> : vector<8x64xf32>
    %71 = tpu.matmul %70, %69, %cst_33 {dimension_numbers = #tpu.dot_dimension_numbers<[1], [0], [0], [1], [0, 0, 1, 1], [], []>} : vector<8x32xbf16>, vector<32x64xbf16>, vector<8x64xf32> -> vector<8x64xf32>
    %c64 = arith.constant 64 : index
    %c0_34 = arith.constant 0 : index
    %72 = vector.load %arg5[%c64, %c0_34] : memref<152x128xf32, #tpu.memory_space<vmem>>, vector<1x64xf32>
    %73 = vector.broadcast %72 : vector<1x64xf32> to vector<8x64xf32>
    %74 = arith.addf %71, %73 : vector<8x64xf32>
    %c208 = arith.constant 208 : index
    %c0_35 = arith.constant 0 : index
    %75 = vector.load %arg4[%c208, %c0_35] : memref<528x128xbf16, #tpu.memory_space<vmem>>, vector<32x64xbf16>
    %76 = arith.truncf %32 : vector<16x32xf32> to vector<16x32xbf16>
    %cst_36 = arith.constant dense<0.000000e+00> : vector<16x64xf32>
    %77 = tpu.matmul %76, %75, %cst_36 {dimension_numbers = #tpu.dot_dimension_numbers<[1], [0], [0], [1], [0, 0, 1, 1], [], []>} : vector<16x32xbf16>, vector<32x64xbf16>, vector<16x64xf32> -> vector<16x64xf32>
    %c72 = arith.constant 72 : index
    %c0_37 = arith.constant 0 : index
    %78 = vector.load %arg5[%c72, %c0_37] : memref<152x128xf32, #tpu.memory_space<vmem>>, vector<16x64xf32>
    %79 = arith.addf %77, %78 : vector<16x64xf32>
    %80 = arith.truncf %74 : vector<8x64xf32> to vector<8x64xbf16>
    %81 = arith.truncf %79 : vector<16x64xf32> to vector<16x64xbf16>
    %cst_38 = arith.constant dense<0.000000e+00> : vector<8x16xf32>
    %82 = tpu.matmul %80, %81, %cst_38 {dimension_numbers = #tpu.dot_dimension_numbers<[1], [1], [0], [0], [0, 0, 1, 0], [], []>} : vector<8x64xbf16>, vector<16x64xbf16>, vector<8x16xf32> -> vector<8x16xf32>
    %cst_39 = arith.constant 0.176776692 : f32
    %83 = vector.broadcast %cst_39 : f32 to vector<8x16xf32>
    %84 = arith.mulf %82, %83 : vector<8x16xf32>
    %cst_40 = arith.constant dense<0xFF800000> : vector<8xf32>
    %85 = vector.multi_reduction <maximumf>, %84, %cst_40 [1] : vector<8x16xf32> to vector<8xf32>
    %86 = vector.shape_cast %85 : vector<8xf32> to vector<8x1xf32>
    %87 = vector.broadcast %86 : vector<8x1xf32> to vector<8x16xf32>
    %88 = arith.subf %84, %87 : vector<8x16xf32>
    %89 = math.exp %88 : vector<8x16xf32>
    %cst_41 = arith.constant dense<0.000000e+00> : vector<8xf32>
    %90 = vector.multi_reduction <add>, %89, %cst_41 [1] : vector<8x16xf32> to vector<8xf32>
    %91 = vector.shape_cast %90 : vector<8xf32> to vector<8x1xf32>
    %92 = tpu.reciprocal %91 {approx = true} : vector<8x1xf32> -> vector<8x1xf32>
    %93 = vector.broadcast %92 : vector<8x1xf32> to vector<8x16xf32>
    %94 = arith.mulf %89, %93 : vector<8x16xf32>
    %95 = arith.truncf %94 : vector<8x16xf32> to vector<8x16xbf16>
    %96 = arith.truncf %79 : vector<16x64xf32> to vector<16x64xbf16>
    %cst_42 = arith.constant dense<0.000000e+00> : vector<8x64xf32>
    %97 = tpu.matmul %95, %96, %cst_42 {dimension_numbers = #tpu.dot_dimension_numbers<[1], [0], [0], [1], [0, 0, 1, 1], [], []>} : vector<8x16xbf16>, vector<16x64xbf16>, vector<8x64xf32> -> vector<8x64xf32>
    %c240 = arith.constant 240 : index
    %c0_43 = arith.constant 0 : index
    %98 = vector.load %arg4[%c240, %c0_43] : memref<528x128xbf16, #tpu.memory_space<vmem>>, vector<64x32xbf16>
    %99 = arith.truncf %97 : vector<8x64xf32> to vector<8x64xbf16>
    %cst_44 = arith.constant dense<0.000000e+00> : vector<8x32xf32>
    %100 = tpu.matmul %99, %98, %cst_44 {dimension_numbers = #tpu.dot_dimension_numbers<[1], [0], [0], [1], [0, 0, 1, 1], [], []>} : vector<8x64xbf16>, vector<64x32xbf16>, vector<8x32xf32> -> vector<8x32xf32>
    %101 = arith.addf %68, %100 : vector<8x32xf32>
    %c88 = arith.constant 88 : index
    %c0_45 = arith.constant 0 : index
    %102 = vector.load %arg5[%c88, %c0_45] : memref<152x128xf32, #tpu.memory_space<vmem>>, vector<1x32xf32>
    %103 = vector.broadcast %102 : vector<1x32xf32> to vector<8x32xf32>
    %104 = arith.addf %101, %103 : vector<8x32xf32>
    %c304 = arith.constant 304 : index
    %c0_46 = arith.constant 0 : index
    %105 = vector.load %arg4[%c304, %c0_46] : memref<528x128xbf16, #tpu.memory_space<vmem>>, vector<32x64xbf16>
    %106 = arith.truncf %104 : vector<8x32xf32> to vector<8x32xbf16>
    %cst_47 = arith.constant dense<0.000000e+00> : vector<8x64xf32>
    %107 = tpu.matmul %106, %105, %cst_47 {dimension_numbers = #tpu.dot_dimension_numbers<[1], [0], [0], [1], [0, 0, 1, 1], [], []>} : vector<8x32xbf16>, vector<32x64xbf16>, vector<8x64xf32> -> vector<8x64xf32>
    %c96 = arith.constant 96 : index
    %c0_48 = arith.constant 0 : index
    %108 = vector.load %arg5[%c96, %c0_48] : memref<152x128xf32, #tpu.memory_space<vmem>>, vector<1x64xf32>
    %109 = vector.broadcast %108 : vector<1x64xf32> to vector<8x64xf32>
    %110 = arith.addf %107, %109 : vector<8x64xf32>
    %111 = arith.mulf %110, %110 : vector<8x64xf32>
    %112 = arith.mulf %110, %111 : vector<8x64xf32>
    %cst_49 = arith.constant 4.471500e-02 : f32
    %113 = vector.broadcast %cst_49 : f32 to vector<8x64xf32>
    %114 = arith.mulf %113, %112 : vector<8x64xf32>
    %115 = arith.addf %110, %114 : vector<8x64xf32>
    %cst_50 = arith.constant 0.797884583 : f32
    %116 = vector.broadcast %cst_50 : f32 to vector<8x64xf32>
    %117 = arith.mulf %116, %115 : vector<8x64xf32>
    %118 = math.tanh %117 : vector<8x64xf32>
    %cst_51 = arith.constant 1.000000e+00 : f32
    %119 = vector.broadcast %cst_51 : f32 to vector<8x64xf32>
    %120 = arith.addf %119, %118 : vector<8x64xf32>
    %cst_52 = arith.constant 5.000000e-01 : f32
    %121 = vector.broadcast %cst_52 : f32 to vector<8x64xf32>
    %122 = arith.mulf %121, %120 : vector<8x64xf32>
    %123 = arith.mulf %110, %122 : vector<8x64xf32>
    %c336 = arith.constant 336 : index
    %c0_53 = arith.constant 0 : index
    %124 = vector.load %arg4[%c336, %c0_53] : memref<528x128xbf16, #tpu.memory_space<vmem>>, vector<64x32xbf16>
    %125 = arith.truncf %123 : vector<8x64xf32> to vector<8x64xbf16>
    %cst_54 = arith.constant dense<0.000000e+00> : vector<8x32xf32>
    %126 = tpu.matmul %125, %124, %cst_54 {dimension_numbers = #tpu.dot_dimension_numbers<[1], [0], [0], [1], [0, 0, 1, 1], [], []>} : vector<8x64xbf16>, vector<64x32xbf16>, vector<8x32xf32> -> vector<8x32xf32>
    %127 = arith.addf %104, %126 : vector<8x32xf32>
    %c104 = arith.constant 104 : index
    %c0_55 = arith.constant 0 : index
    %128 = vector.load %arg5[%c104, %c0_55] : memref<152x128xf32, #tpu.memory_space<vmem>>, vector<1x32xf32>
    %129 = vector.broadcast %128 : vector<1x32xf32> to vector<8x32xf32>
    %130 = arith.addf %127, %129 : vector<8x32xf32>
    %131 = vector.extract_strided_slice %130 {offsets = [0, 0], sizes = [1, 32], strides = [1, 1]} : vector<8x32xf32> to vector<1x32xf32>
    %132 = vector.extract_strided_slice %130 {offsets = [1, 0], sizes = [4, 32], strides = [1, 1]} : vector<8x32xf32> to vector<4x32xf32>
    %c400 = arith.constant 400 : index
    %c0_56 = arith.constant 0 : index
    %133 = vector.load %arg4[%c400, %c0_56] : memref<528x128xbf16, #tpu.memory_space<vmem>>, vector<32x8xbf16>
    %134 = arith.truncf %132 : vector<4x32xf32> to vector<4x32xbf16>
    %cst_57 = arith.constant dense<0.000000e+00> : vector<4x8xf32>
    %135 = tpu.matmul %134, %133, %cst_57 {dimension_numbers = #tpu.dot_dimension_numbers<[1], [0], [0], [1], [0, 0, 1, 1], [], []>} : vector<4x32xbf16>, vector<32x8xbf16>, vector<4x8xf32> -> vector<4x8xf32>
    %c112 = arith.constant 112 : index
    %c0_58 = arith.constant 0 : index
    %136 = vector.load %arg5[%c112, %c0_58] : memref<152x128xf32, #tpu.memory_space<vmem>>, vector<1x8xf32>
    %137 = vector.broadcast %136 : vector<1x8xf32> to vector<4x8xf32>
    %138 = arith.addf %135, %137 : vector<4x8xf32>
    %c432 = arith.constant 432 : index
    %c0_59 = arith.constant 0 : index
    %139 = vector.load %arg4[%c432, %c0_59] : memref<528x128xbf16, #tpu.memory_space<vmem>>, vector<32x8xbf16>
    %140 = arith.truncf %32 : vector<16x32xf32> to vector<16x32xbf16>
    %cst_60 = arith.constant dense<0.000000e+00> : vector<16x8xf32>
    %141 = tpu.matmul %140, %139, %cst_60 {dimension_numbers = #tpu.dot_dimension_numbers<[1], [0], [0], [1], [0, 0, 1, 1], [], []>} : vector<16x32xbf16>, vector<32x8xbf16>, vector<16x8xf32> -> vector<16x8xf32>
    %c120 = arith.constant 120 : index
    %c0_61 = arith.constant 0 : index
    %142 = vector.load %arg5[%c120, %c0_61] : memref<152x128xf32, #tpu.memory_space<vmem>>, vector<1x8xf32>
    %143 = vector.broadcast %142 : vector<1x8xf32> to vector<16x8xf32>
    %144 = arith.addf %141, %143 : vector<16x8xf32>
    %c464 = arith.constant 464 : index
    %c0_62 = arith.constant 0 : index
    %145 = vector.load %arg4[%c464, %c0_62] : memref<528x128xbf16, #tpu.memory_space<vmem>>, vector<32x32xbf16>
    %146 = arith.truncf %131 : vector<1x32xf32> to vector<1x32xbf16>
    %cst_63 = arith.constant dense<0.000000e+00> : vector<1x32xf32>
    %147 = tpu.matmul %146, %145, %cst_63 {dimension_numbers = #tpu.dot_dimension_numbers<[1], [0], [0], [1], [0, 0, 1, 1], [], []>} : vector<1x32xbf16>, vector<32x32xbf16>, vector<1x32xf32> -> vector<1x32xf32>
    %c128 = arith.constant 128 : index
    %c0_64 = arith.constant 0 : index
    %148 = vector.load %arg5[%c128, %c0_64] : memref<152x128xf32, #tpu.memory_space<vmem>>, vector<1x32xf32>
    %149 = arith.addf %147, %148 : vector<1x32xf32>
    %150 = arith.mulf %149, %149 : vector<1x32xf32>
    %151 = arith.mulf %149, %150 : vector<1x32xf32>
    %cst_65 = arith.constant 4.471500e-02 : f32
    %152 = vector.broadcast %cst_65 : f32 to vector<1x32xf32>
    %153 = arith.mulf %152, %151 : vector<1x32xf32>
    %154 = arith.addf %149, %153 : vector<1x32xf32>
    %cst_66 = arith.constant 0.797884583 : f32
    %155 = vector.broadcast %cst_66 : f32 to vector<1x32xf32>
    %156 = arith.mulf %155, %154 : vector<1x32xf32>
    %157 = math.tanh %156 : vector<1x32xf32>
    %cst_67 = arith.constant 1.000000e+00 : f32
    %158 = vector.broadcast %cst_67 : f32 to vector<1x32xf32>
    %159 = arith.addf %158, %157 : vector<1x32xf32>
    %cst_68 = arith.constant 5.000000e-01 : f32
    %160 = vector.broadcast %cst_68 : f32 to vector<1x32xf32>
    %161 = arith.mulf %160, %159 : vector<1x32xf32>
    %162 = arith.mulf %149, %161 : vector<1x32xf32>
    %c496 = arith.constant 496 : index
    %c0_69 = arith.constant 0 : index
    %163 = vector.load %arg4[%c496, %c0_69] : memref<528x128xbf16, #tpu.memory_space<vmem>>, vector<32x4xbf16>
    %164 = arith.truncf %162 : vector<1x32xf32> to vector<1x32xbf16>
    %cst_70 = arith.constant dense<0.000000e+00> : vector<1x4xf32>
    %165 = tpu.matmul %164, %163, %cst_70 {dimension_numbers = #tpu.dot_dimension_numbers<[1], [0], [0], [1], [0, 0, 1, 1], [], []>} : vector<1x32xbf16>, vector<32x4xbf16>, vector<1x4xf32> -> vector<1x4xf32>
    %c136 = arith.constant 136 : index
    %c0_71 = arith.constant 0 : index
    %166 = vector.load %arg5[%c136, %c0_71] : memref<152x128xf32, #tpu.memory_space<vmem>>, vector<1x4xf32>
    %167 = arith.addf %165, %166 : vector<1x4xf32>
    %c144_72 = arith.constant 144 : index
    %c0_73 = arith.constant 0 : index
    %168 = vector.load %arg5[%c144_72, %c0_73] : memref<152x128xf32, #tpu.memory_space<vmem>>, vector<1x4xf32>
    %169 = arith.addf %167, %168 : vector<1x4xf32>
    %170 = tpu.iota {dimensions = array<i32: 1>} : vector<1x4xi32>
    %171 = arith.sitofp %170 : vector<1x4xi32> to vector<1x4xf32>
    %cst_74 = arith.constant dense<0xFF800000> : vector<1xf32>
    %172 = vector.multi_reduction <maximumf>, %169, %cst_74 [1] : vector<1x4xf32> to vector<1xf32>
    %173 = vector.shape_cast %172 : vector<1xf32> to vector<1x1xf32>
    %174 = vector.broadcast %173 : vector<1x1xf32> to vector<1x4xf32>
    %175 = arith.cmpf oeq, %169, %174 : vector<1x4xf32>
    %cst_75 = arith.constant 4.000000e+00 : f32
    %176 = vector.broadcast %cst_75 : f32 to vector<1x4xf32>
    %177 = arith.select %175, %171, %176 : vector<1x4xi1>, vector<1x4xf32>
    %cst_76 = arith.constant dense<0x7F800000> : vector<1xf32>
    %178 = vector.multi_reduction <minimumf>, %177, %cst_76 [1] : vector<1x4xf32> to vector<1xf32>
    %179 = vector.shape_cast %178 : vector<1xf32> to vector<1x1xf32>
    %180 = vector.broadcast %179 : vector<1x1xf32> to vector<1x4xf32>
    %181 = arith.cmpf oeq, %171, %180 : vector<1x4xf32>
    %182 = arith.extui %181 : vector<1x4xi1> to vector<1x4xi32>
    %183 = arith.sitofp %182 : vector<1x4xi32> to vector<1x4xf32>
    %184 = arith.truncf %183 : vector<1x4xf32> to vector<1x4xbf16>
    %185 = arith.truncf %138 : vector<4x8xf32> to vector<4x8xbf16>
    %cst_77 = arith.constant dense<0.000000e+00> : vector<1x8xf32>
    %186 = tpu.matmul %184, %185, %cst_77 {dimension_numbers = #tpu.dot_dimension_numbers<[1], [0], [0], [1], [0, 0, 1, 1], [], []>} : vector<1x4xbf16>, vector<4x8xbf16>, vector<1x8xf32> -> vector<1x8xf32>
    %187 = arith.truncf %186 : vector<1x8xf32> to vector<1x8xbf16>
    %188 = arith.truncf %144 : vector<16x8xf32> to vector<16x8xbf16>
    %cst_78 = arith.constant dense<0.000000e+00> : vector<1x16xf32>
    %189 = tpu.matmul %187, %188, %cst_78 {dimension_numbers = #tpu.dot_dimension_numbers<[1], [1], [0], [0], [0, 0, 1, 0], [], []>} : vector<1x8xbf16>, vector<16x8xbf16>, vector<1x16xf32> -> vector<1x16xf32>
    %cst_79 = arith.constant 0.000000e+00 : f32
    %190 = vector.broadcast %cst_79 : f32 to vector<1x16xf32>
    %191 = arith.cmpf ogt, %189, %190 : vector<1x16xf32>
    %cst_80 = arith.constant 2.550000e+02 : f32
    %cst_81 = arith.constant 0.000000e+00 : f32
    %192 = vector.broadcast %cst_80 : f32 to vector<1x16xf32>
    %193 = vector.broadcast %cst_81 : f32 to vector<1x16xf32>
    %194 = arith.select %191, %192, %193 : vector<1x16xi1>, vector<1x16xf32>
    %c0_82 = arith.constant 0 : index
    %c0_83 = arith.constant 0 : index
    %195 = vector.load %arg6[%c0_82, %c0_83] : memref<1x16xf32, #tpu.memory_space<vmem>>, vector<1x16xf32>
    tpu.vector_store %arg6[%c0_82, %c0_83], %194 {strides = array<i32>} : memref<1x16xf32, #tpu.memory_space<vmem>>, vector<1x16xf32>,
    %196 = arith.mulf %183, %167 : vector<1x4xf32>
    %cst_84 = arith.constant dense<0.000000e+00> : vector<1xf32>
    %197 = vector.multi_reduction <add>, %196, %cst_84 [1] : vector<1x4xf32> to vector<1xf32>
    %198 = vector.shape_cast %197 : vector<1xf32> to vector<1x1xf32>
    %c0_85 = arith.constant 0 : index
    %c0_86 = arith.constant 0 : index
    %199 = vector.load %arg7[%c0_85, %c0_86] : memref<1x1xf32, #tpu.memory_space<vmem>>, vector<1x1xf32>
    tpu.vector_store %arg7[%c0_85, %c0_86], %198 {strides = array<i32>} : memref<1x1xf32, #tpu.memory_space<vmem>>, vector<1x1xf32>,
    return
  }
  func.func @transform_0(%arg0: i32) -> (i32, i32) {
    %c0_i32 = arith.constant 0 : i32
    %c0_i32_0 = arith.constant 0 : i32
    %c0_i32_1 = arith.constant 0 : i32
    return %c0_i32, %c0_i32_0 : i32, i32
  }
  func.func @transform_1(%arg0: i32) -> (i32, i32) {
    %c0_i32 = arith.constant 0 : i32
    %c0_i32_0 = arith.constant 0 : i32
    %c0_i32_1 = arith.constant 0 : i32
    return %c0_i32, %c0_i32_0 : i32, i32
  }
  func.func @transform_2(%arg0: i32) -> (i32, i32) {
    %c0_i32 = arith.constant 0 : i32
    %c0_i32_0 = arith.constant 0 : i32
    %c0_i32_1 = arith.constant 0 : i32
    return %c0_i32, %c0_i32_0 : i32, i32
  }
  func.func @transform_3(%arg0: i32) -> (i32, i32) {
    %c0_i32 = arith.constant 0 : i32
    %c0_i32_0 = arith.constant 0 : i32
    %c0_i32_1 = arith.constant 0 : i32
    return %c0_i32, %c0_i32_0 : i32, i32
  }
  func.func @transform_4(%arg0: i32) -> (i32, i32) {
    %c0_i32 = arith.constant 0 : i32
    %c0_i32_0 = arith.constant 0 : i32
    %c0_i32_1 = arith.constant 0 : i32
    return %c0_i32, %c0_i32_0 : i32, i32
  }
  func.func @transform_5(%arg0: i32) -> (i32, i32) {
    %c0_i32 = arith.constant 0 : i32
    %c0_i32_0 = arith.constant 0 : i32
    %c0_i32_1 = arith.constant 0 : i32
    return %c0_i32, %c0_i32_0 : i32, i32
  }
  func.func @transform_6(%arg0: i32) -> (i32, i32) {
    %c0_i32 = arith.constant 0 : i32
    %c0_i32_0 = arith.constant 0 : i32
    %c0_i32_1 = arith.constant 0 : i32
    return %c0_i32, %c0_i32_0 : i32, i32
  }
}

</mosaic_0001>

<llo_original>
// kernel: forward.1
$region0: #{forward.1}
  #allocation0 [shape = 'u32[]', space=smem, size = 0x4, offset = 0x4, fixed_abs, tag = 'smem constant byte address 0x4 - core index']
  #allocation1 [shape = 'u32[144,128]{1,0:T(1,128)}', space=vmem, size = 0x12000, scoped, tag = 'internal scratch']
  %s0 = inlined_call_operand.vmem [shape: f32[16,48], index: 0, kind: input, shape index: {}]
  %s1 = inlined_call_operand.vmem [shape: f32[3,2], index: 1, kind: input, shape index: {}]
  %s2 = inlined_call_operand.vmem [shape: f32[3,1], index: 2, kind: input, shape index: {}]
  %s3 = inlined_call_operand.vmem [shape: bf16[528,128], index: 3, kind: input, shape index: {}]
  %s4 = inlined_call_operand.vmem [shape: f32[152,128], index: 4, kind: input, shape index: {}]
  %s5 = inlined_call_operand.vmem [shape: f32[1,16], index: 5, kind: output, shape index: {0}]
  %s6 = inlined_call_operand.hbm [shape: f32[1,1], index: 6, kind: output, shape index: {1}]
  %7 = xla_tuple %s5, %s6
  %s8 = sld [smem:[#allocation0]]
  $region38: #{forward.1} parent=0
    _
  %s10 = ssub.s32 1, %s8
  %s11 = scalar_select 0, %s10, %s8
  $region1: #{forward.1} parent=0
    #allocation2 [shape = 'u8[512]{0}', space=vmem, size = 0x400, scoped, tag = 'output window, operand 1, single buffered']
    #allocation3 [shape = 's32[1]{0}', space=sflag, size = 0x4, scoped, tag = 'scoped memory for forward.1']
    %12 = vsyncpa [#allocation3], 0
    // Predicated region
    $region2: #{forward.1} parent=1 // pred_check
      _
    $region3: #{forward.1} parent=1 // pred_check_branch
      %14 = sbr.rel (0) target = $region5
    $region4: #{forward.1} parent=1 // pred_region
      _
    $region5: #{forward.1} parent=1 // pred_fallthru
      _
    // Predicated region
    $region6: #{forward.1} parent=1 // pred_check
      _
    $region7: #{forward.1} parent=1 // pred_check_branch
      %16 = sbr.rel (0) target = $region9
    $region8: #{forward.1} parent=1 // pred_region
      _
    $region9: #{forward.1} parent=1 // pred_fallthru
      _
    // Predicated region
    $region10: #{forward.1} parent=1 // pred_check
      _
    $region11: #{forward.1} parent=1 // pred_check_branch
      %18 = sbr.rel (0) target = $region13
    $region12: #{forward.1} parent=1 // pred_region
      _
    $region13: #{forward.1} parent=1 // pred_fallthru
      _
    // Predicated region
    $region14: #{forward.1} parent=1 // pred_check
      _
    $region15: #{forward.1} parent=1 // pred_check_branch
      %20 = sbr.rel (0) target = $region17
    $region16: #{forward.1} parent=1 // pred_region
      _
    $region17: #{forward.1} parent=1 // pred_fallthru
      _
    // Predicated region
    $region18: #{forward.1} parent=1 // pred_check
      _
    $region19: #{forward.1} parent=1 // pred_check_branch
      %22 = sbr.rel (0) target = $region21
    $region20: #{forward.1} parent=1 // pred_region
      _
    $region21: #{forward.1} parent=1 // pred_fallthru
      _
    %v24 = vld [vmem:[%s0] sm:$0xff]
    %v25 = vld [vmem:[%s0 + $0x8] sm:$0xff]
    %v26 = vld [vmem:[%s3] sm:$0xf]
    %v27 = vld [vmem:[%s3 + $0x4] sm:$0xf]
    %v28 = vld [vmem:[%s3 + $0x8] sm:$0xf]
    %v29 = vld [vmem:[%s3 + $0xc] sm:$0xf]
    %v30 = vld [vmem:[%s3 + $0x10] sm:$0xf]
    %v31 = vld [vmem:[%s3 + $0x14] sm:$0xf]
    %v32 = vpack.c.bf16 %v25, %v24
    %v33 = vld [vmem:[%s4] sm:$0x1]
    %v34 = vlaneseq
    %v35 = vshrl.u32 %v34, 7
    %v36 = vsub.s32 0, %v35
    %v37 = vrot.slane %v33, %v36
    %v44 = vunpack.c.l.b16 %v26
    %v45 = vunpack.c.l.b16 %v27
    %v46 = vunpack.c.l.b16 %v28
    %v47 = vunpack.c.l.b16 %v29
    %v48 = vunpack.c.l.b16 %v30
    %v49 = vunpack.c.l.b16 %v31
    %v50 = vpack.c.b16 %v45, %v44
    %v51 = vpack.c.b16 %v47, %v46
    %v52 = vpack.c.b16 %v49, %v48
    %vm56 = vcmask 392192
    %v58 = vsel %vm56, %v32, 0
    %60 = vmatprep.subr.bf16.mxu0 0
    %61 = vmatpush1.bf16.msra.mxu0 0
    %62 = vmatprep.subr.bf16.mxu0 0
    %63 = vmatpush1.bf16.msra.mxu0 0
    %64 = vmatprep.subr.bf16.mxu0 0
    %65 = vmatpush1.bf16.msra.mxu0 0
    %66 = vmatprep.subr.bf16.mxu0 0
    %67 = vmatpush1.bf16.msra.mxu0 0
    %68 = vmatprep.subr.bf16.mxu0 0
    %69 = vmatpush1.bf16.msra.mxu0 0
    %70 = vmatprep.subr.bf16.mxu0 0
    %71 = vmatpush1.bf16.msra.mxu0 %v52
    %72 = vmatprep.subr.bf16.mxu0 0
    %73 = vmatpush1.bf16.msra.mxu0 %v51
    %74 = vmatprep.subr.bf16.mxu0 0
    %75 = vmatpush1.bf16.msra.mxu0 %v50
    %76 = vmatprep.subr.bf16.mxu0 0
    %77 = vmatpush2.bf16.msra.mxu0 0
    %78 = vmatprep.subr.bf16.mxu0 0
    %79 = vmatpush2.bf16.msra.mxu0 0
    %80 = vmatprep.subr.bf16.mxu0 0
    %81 = vmatpush2.bf16.msra.mxu0 0
    %82 = vmatprep.subr.bf16.mxu0 0
    %83 = vmatpush2.bf16.msra.mxu0 0
    %84 = vmatprep.subr.bf16.mxu0 0
    %85 = vmatpush2.bf16.msra.mxu0 0
    %86 = vmatprep.subr.bf16.mxu0 0
    %87 = vmatpush2.bf16.msra.mxu0 0
    %88 = vmatprep.subr.bf16.mxu0 0
    %89 = vmatpush2.bf16.msra.mxu0 0
    %90 = vmatprep.subr.bf16.mxu0 0
    %91 = vmatpush2.bf16.msra.mxu0 0
    %92 = vmatprep.mubr.bf16.mxu0 0
    %93 = vmatmul.mubr.bf16.gmra.mxu0 %v58
    %v94 = vpop.f32.mrf.mxu0
    %v95 = vadd.f32 %v37, %v94
    %v96 = vpop.f32.mrf.mxu0
    %v97 = vpop.f32.mrf.mxu0
    %v98 = vadd.f32 %v37, %v97
    %v99 = vpop.f32.mrf.mxu0
    %100 = vdwg.mxu0
    %v101 = vld [vmem:[%s3 + $0x18] sm:$0xf]
    %v102 = vld [vmem:[%s3 + $0x1c] sm:$0xf]
    %v103 = vld [vmem:[%s3 + $0x20] sm:$0xf]
    %v104 = vld [vmem:[%s3 + $0x24] sm:$0xf]
    %v105 = vpack.c.bf16 %v98, %v95
    %v106 = vld [vmem:[%s4 + $0x8] sm:$0x1]
    %v107 = vlaneseq
    %v108 = vshrl.u32 %v107, 7
    %v109 = vsub.s32 0, %v108
    %v110 = vrot.slane %v106, %v109
    %v115 = vunpack.c.l.b16 %v101
    %v116 = vunpack.c.l.b16 %v102
    %v117 = vunpack.c.l.b16 %v103
    %v118 = vunpack.c.l.b16 %v104
    %v119 = vpack.c.b16 %v116, %v115
    %v120 = vpack.c.b16 %v118, %v117
    %vm123 = vcmask 261120
    %v125 = vsel %vm123, %v105, 0
    %127 = vmatprep.subr.bf16.mxu0 0
    %128 = vmatpush1.bf16.msra.mxu0 0
    %129 = vmatprep.subr.bf16.mxu0 0
    %130 = vmatpush1.bf16.msra.mxu0 0
    %131 = vmatprep.subr.bf16.mxu0 0
    %132 = vmatpush1.bf16.msra.mxu0 0
    %133 = vmatprep.subr.bf16.mxu0 0
    %134 = vmatpush1.bf16.msra.mxu0 0
    %135 = vmatprep.subr.bf16.mxu0 0
    %136 = vmatpush1.bf16.msra.mxu0 0
    %137 = vmatprep.subr.bf16.mxu0 0
    %138 = vmatpush1.bf16.msra.mxu0 0
    %139 = vmatprep.subr.bf16.mxu0 0
    %140 = vmatpush1.bf16.msra.mxu0 %v120
    %141 = vmatprep.subr.bf16.mxu0 0
    %142 = vmatpush1.bf16.msra.mxu0 %v119
    %143 = vmatprep.subr.bf16.mxu0 0
    %144 = vmatpush2.bf16.msra.mxu0 0
    %145 = vmatprep.subr.bf16.mxu0 0
    %146 = vmatpush2.bf16.msra.mxu0 0
    %147 = vmatprep.subr.bf16.mxu0 0
    %148 = vmatpush2.bf16.msra.mxu0 0
    %149 = vmatprep.subr.bf16.mxu0 0
    %150 = vmatpush2.bf16.msra.mxu0 0
    %151 = vmatprep.subr.bf16.mxu0 0
    %152 = vmatpush2.bf16.msra.mxu0 0
    %153 = vmatprep.subr.bf16.mxu0 0
    %154 = vmatpush2.bf16.msra.mxu0 0
    %155 = vmatprep.subr.bf16.mxu0 0
    %156 = vmatpush2.bf16.msra.mxu0 0
    %157 = vmatprep.subr.bf16.mxu0 0
    %158 = vmatpush2.bf16.msra.mxu0 0
    %159 = vmatprep.mubr.bf16.mxu0 0
    %160 = vmatmul.mubr.bf16.gmra.mxu0 %v125
    %v161 = vpop.f32.mrf.mxu0
    %v162 = vadd.f32 %v110, %v161
    %v163 = vpop.f32.mrf.mxu0
    %v164 = vpop.f32.mrf.mxu0
    %v165 = vadd.f32 %v110, %v164
    %v166 = vpop.f32.mrf.mxu0
    %167 = vdwg.mxu0
    %v168 = vmul.f32 %v162, %v162
    %v169 = vmul.f32 %v165, %v165
    %v170 = vmul.f32 %v162, %v168
    %v171 = vmul.f32 %v165, %v169
    %v172 = vmul.f32 %v170, 0.044715
    %v173 = vmul.f32 %v171, 0.044715
    %v174 = vadd.f32 %v162, %v172
    %v175 = vadd.f32 %v165, %v173
    %v176 = vmul.f32 %v174, 0.7978846
    %v177 = vmul.f32 %v175, 0.7978846
    %v178 = vtanh.pop %v176
    %v179 = vtanh.pop %v177
    %v180 = vadd.f32 %v178, 1.0
    %v181 = vadd.f32 %v179, 1.0
    %v182 = vmul.f32 %v180, 0.5
    %v183 = vmul.f32 %v181, 0.5
    %v184 = vmul.f32 %v162, %v182
    %v185 = vmul.f32 %v165, %v183
    %v186 = vld [vmem:[%s3 + $0x28] sm:$0xf]
    %v187 = vld [vmem:[%s3 + $0x2c] sm:$0xf]
    %v188 = vld [vmem:[%s3 + $0x30] sm:$0xf]
    %v189 = vld [vmem:[%s3 + $0x34] sm:$0xf]
    %v190 = vld [vmem:[%s3 + $0x38] sm:$0xf]
    %v191 = vld [vmem:[%s3 + $0x3c] sm:$0xf]
    %v192 = vld [vmem:[%s3 + $0x40] sm:$0xf]
    %v193 = vld [vmem:[%s3 + $0x44] sm:$0xf]
    %v194 = vpack.c.bf16 %v185, %v184
    %v203 = vunpack.c.l.b16 %v186
    %v204 = vunpack.c.l.b16 %v187
    %v205 = vunpack.c.l.b16 %v188
    %v206 = vunpack.c.l.b16 %v189
    %v207 = vunpack.c.l.b16 %v190
    %v208 = vunpack.c.l.b16 %v191
    %v209 = vunpack.c.l.b16 %v192
    %v210 = vunpack.c.l.b16 %v193
    %v211 = vpack.c.b16 %v204, %v203
    %v212 = vpack.c.b16 %v206, %v205
    %v213 = vpack.c.b16 %v208, %v207
    %v214 = vpack.c.b16 %v210, %v209
    %vm219 = vcmask 523264
    %v221 = vsel %vm219, %v194, 0
    %223 = vmatprep.subr.bf16.mxu0 0
    %224 = vmatpush1.bf16.msra.mxu0 0
    %225 = vmatprep.subr.bf16.mxu0 0
    %226 = vmatpush1.bf16.msra.mxu0 0
    %227 = vmatprep.subr.bf16.mxu0 0
    %228 = vmatpush1.bf16.msra.mxu0 0
    %229 = vmatprep.subr.bf16.mxu0 0
    %230 = vmatpush1.bf16.msra.mxu0 0
    %231 = vmatprep.subr.bf16.mxu0 0
    %232 = vmatpush1.bf16.msra.mxu0 %v214
    %233 = vmatprep.subr.bf16.mxu0 0
    %234 = vmatpush1.bf16.msra.mxu0 %v213
    %235 = vmatprep.subr.bf16.mxu0 0
    %236 = vmatpush1.bf16.msra.mxu0 %v212
    %237 = vmatprep.subr.bf16.mxu0 0
    %238 = vmatpush1.bf16.msra.mxu0 %v211
    %239 = vmatprep.subr.bf16.mxu0 0
    %240 = vmatpush2.bf16.msra.mxu0 0
    %241 = vmatprep.subr.bf16.mxu0 0
    %242 = vmatpush2.bf16.msra.mxu0 0
    %243 = vmatprep.subr.bf16.mxu0 0
    %244 = vmatpush2.bf16.msra.mxu0 0
    %245 = vmatprep.subr.bf16.mxu0 0
    %246 = vmatpush2.bf16.msra.mxu0 0
    %247 = vmatprep.subr.bf16.mxu0 0
    %248 = vmatpush2.bf16.msra.mxu0 0
    %249 = vmatprep.subr.bf16.mxu0 0
    %250 = vmatpush2.bf16.msra.mxu0 0
    %251 = vmatprep.subr.bf16.mxu0 0
    %252 = vmatpush2.bf16.msra.mxu0 0
    %253 = vmatprep.subr.bf16.mxu0 0
    %254 = vmatpush2.bf16.msra.mxu0 0
    %255 = vmatprep.mubr.bf16.mxu0 0
    %256 = vmatmul.mubr.bf16.gmra.mxu0 %v221
    %v257 = vpop.f32.mrf.mxu0
    %v258 = vadd.f32 0.0, %v257
    %v259 = vpop.f32.mrf.mxu0
    %v260 = vpop.f32.mrf.mxu0
    %v261 = vadd.f32 0.0, %v260
    %v262 = vpop.f32.mrf.mxu0
    %263 = vdwg.mxu0
    %v264 = vadd.f32 %v95, %v258
    %v265 = vadd.f32 %v98, %v261
    %v266 = vld [vmem:[%s4 + $0x10] sm:$0x1]
    %v267 = vlaneseq
    %v268 = vshrl.u32 %v267, 7
    %v269 = vsub.s32 0, %v268
    %v270 = vrot.slane %v266, %v269
    %v271 = vadd.f32 %v264, %v270
    %v272 = vadd.f32 %v265, %v270
    %v273 = vld [vmem:[%s1] sm:$0x7]
    %v274 = vld [vmem:[%s3 + $0x48] sm:$0x1]
    %v275 = vpack.c.bf16 %v273, %v273
    %vm276 = vcmask 15360
    %v278 = vsel %vm276, %v275, 0
    %vm280 = vcmask 1040384
    %v282 = vsel %vm280, %v274, 0
    %284 = vmatprep.subr.bf16.mxu0 0
    %285 = vmatpush1.bf16.msra.mxu0 0
    %286 = vmatprep.subr.bf16.mxu0 0
    %287 = vmatpush1.bf16.msra.mxu0 0
    %288 = vmatprep.subr.bf16.mxu0 0
    %289 = vmatpush1.bf16.msra.mxu0 0
    %290 = vmatprep.subr.bf16.mxu0 0
    %291 = vmatpush1.bf16.msra.mxu0 0
    %292 = vmatprep.subr.bf16.mxu0 0
    %293 = vmatpush1.bf16.msra.mxu0 0
    %294 = vmatprep.subr.bf16.mxu0 0
    %295 = vmatpush1.bf16.msra.mxu0 0
    %296 = vmatprep.subr.bf16.mxu0 0
    %297 = vmatpush1.bf16.msra.mxu0 0
    %298 = vmatprep.subr.bf16.mxu0 0
    %299 = vmatpush1.bf16.msra.mxu0 %v282
    %300 = vmatprep.subr.bf16.mxu0 0
    %301 = vmatpush2.bf16.msra.mxu0 0
    %302 = vmatprep.subr.bf16.mxu0 0
    %303 = vmatpush2.bf16.msra.mxu0 0
    %304 = vmatprep.subr.bf16.mxu0 0
    %305 = vmatpush2.bf16.msra.mxu0 0
    %306 = vmatprep.subr.bf16.mxu0 0
    %307 = vmatpush2.bf16.msra.mxu0 0
    %308 = vmatprep.subr.bf16.mxu0 0
    %309 = vmatpush2.bf16.msra.mxu0 0
    %310 = vmatprep.subr.bf16.mxu0 0
    %311 = vmatpush2.bf16.msra.mxu0 0
    %312 = vmatprep.subr.bf16.mxu0 0
    %313 = vmatpush2.bf16.msra.mxu0 0
    %314 = vmatprep.subr.bf16.mxu0 0
    %315 = vmatpush2.bf16.msra.mxu0 0
    %316 = vmatprep.mubr.bf16.mxu0 0
    %317 = vmatmul.mubr.bf16.gmra.mxu0 %v278
    %v318 = vpop.f32.mrf.mxu0
    %v319 = vadd.f32 0.0, %v318
    %v320 = vpop.f32.mrf.mxu0
    %v321 = vpop.f32.mrf.mxu0
    %v322 = vpop.f32.mrf.mxu0
    %323 = vdwg.mxu0
    %v324 = vmul.f32 %v319, 6.2831855
    %v325 = vld [vmem:[%s4 + $0x18] sm:$0x1]
    %v326 = vlaneseq
    %v327 = vshrl.u32 %v326, 7
    %v328 = vsub.s32 0, %v327
    %v329 = vrot.slane %v325, %v328
    %v330 = vadd.f32 %v324, %v329
    %v331 = vand.u32 2147483647, %v330
    %vm332 = vcmp.le.f32.partialorder %v331, 0.7853982
    %vm333 = vcmp.lt.s32.totalorder %v330, 0
    %v334 = vand.u32 %v330, 2139095040
    %v335 = vshrl.u32 %v334, 23
    %v336 = vsub.s32 %v335, 127
    %v337 = vand.u32 2147483647, %v330
    %v338 = vand.u32 %v337, 8388607
    %v339 = vor.u32 %v338, 8388608
    %v340 = vsub.s32 0, %v339
    %v341 = vadd.s32 %v336, 1
    %vm342 = vcmp.gt.s32.totalorder %v341, 0
    %v343 = vsel %vm342, %v341, 0
    %v344 = vshrl.u32 %v343, 5
    %v345 = vand.u32 %v343, 31
    %v346 = vsub.s32 32, %v345
    %v347 = vshrl.u32 683565275, %v346
    %v348 = vshll.u32 683565275, %v345
    %v349 = vshrl.u32 2475754826, %v346
    %v350 = vor.u32 %v348, %v349
    %v351 = vshll.u32 2475754826, %v345
    %v352 = vshrl.u32 2131351028, %v346
    %v353 = vor.u32 %v351, %v352
    %v354 = vshll.u32 2131351028, %v345
    %v355 = vshrl.u32 2102212464, %v346
    %v356 = vor.u32 %v354, %v355
    %v357 = vshll.u32 2102212464, %v345
    %v358 = vshrl.u32 920167782, %v346
    %v359 = vor.u32 %v357, %v358
    %v360 = vshll.u32 920167782, %v345
    %v361 = vshrl.u32 1326507024, %v346
    %v362 = vor.u32 %v360, %v361
    %vm363 = vcmp.lt.s32.totalorder %v344, 1
    %vm364 = vcmp.lt.s32.totalorder %v344, 2
    %vm365 = vcmp.lt.s32.totalorder %v344, 3
    %vm366 = vcmp.lt.s32.totalorder %v344, 4
    %v367 = vsel %vm363, %v347, %v350
    %v368 = vsel %vm366, %v356, 2102212464
    %v369 = vsel %vm365, %v353, %v368
    %v370 = vsel %vm364, %v367, %v369
    %v371 = vsel %vm363, %v350, %v353
    %v372 = vsel %vm366, %v359, 920167782
    %v373 = vsel %vm365, %v356, %v372
    %v374 = vsel %vm364, %v371, %v373
    %v375 = vsel %vm363, %v353, %v356
    %v376 = vsel %vm366, %v362, 1326507024
    %v377 = vsel %vm365, %v359, %v376
    %v378 = vsel %vm364, %v375, %v377
    %v379 = vshll.u32 %v339, 8
    %v380 = vmul.u32.u64.compose %v379, %v378
    %v381 = vextract.low.u32 %v380
    %v382 = vextract.high.u32 %v380
    %v383 = vmul.u32.u64.compose %v379, %v374
    %v384 = vextract.low.u32 %v383
    %v385 = vextract.high.u32 %v383
    %v386 = vmul.u32 %v379, %v370
    %v387 = vadd.s32 %v382, %v384
    %vm388 = vc.u32 %v382, %v384
    %v389 = vadd.s32 %v385, 1
    %v390 = vsel %vm388, %v389, %v385
    %v391 = vadd.s32 %v386, %v390
    %v392 = vadd.s32 %v391, 536870912
    %v393 = vshrl.u32 %v392, 30
    %v394 = vshll.u32 %v393, 30
    %v395 = vsub.s32 %v391, %v394
    %vm396 = vcmp.lt.s32.totalorder %v395, 0
    %v397 = vsub.s32 0, %v395
    %v398 = vsel %vm396, %v397, %v395
    %v399 = vclz %v398
    %v400 = vsub.s32 %v399, 2
    %vm401 = vcmp.gt.s32.totalorder 0, %v400
    %v402 = vsel %vm401, 0, %v400
    %v403 = vsub.s32 32, %v402
    %v404 = vshll.u32 %v395, %v402
    %v405 = vshrl.u32 %v387, %v403
    %v406 = vor.u32 %v404, %v405
    %v407 = vsub.s32 4294967266, %v402
    %v408 = vadd.s32 %v407, 127
    %v409 = vshll.u32 %v408, 23
    %v410 = vor.u32 4788187, %v409
    %v411 = vand.u32 2147483647, %v410
    %v413 = vcvt.s32.f32 %v406
    %v414 = vmul.f32 %v413, %v411
    %v415 = vxor.u32 %v414, 2147483648
    %v416 = vsel %vm333, %v415, %v414
    %v417 = vsub.s32 4, %v393
    %v418 = vsel %vm333, %v417, %v393
    %v419 = vsel %vm332, %v330, %v416
    %v420 = vsel %vm332, 0, %v418
    %v421 = vcosq.f32.pop %v419
    %v422 = vsinq.f32.pop %v419
    %vm423 = vweird.f32 %v330
    %v424 = vadd.s32 %v420, 3
    %v425 = vand.u32 %v424, 3
    %vm426 = vcmp.lt.s32.totalorder %v425, 2
    %vm427 = vcmp.eq.s32.totalorder %v425, 0
    %v428 = vxor.u32 %v422, 2147483648
    %v429 = vsel %vm427, %v421, %v428
    %vm430 = vcmp.eq.s32.totalorder %v425, 2
    %v431 = vxor.u32 %v421, 2147483648
    %v432 = vsel %vm430, %v431, %v422
    %v433 = vsel %vm426, %v429, %v432
    %v434 = vsel %vm423, nan, %v433
    %v435 = vld [vmem:[%s2] sm:$0x7]
    %vm436 = vcmp.eq.f32.partialorder %v435, 0.0
    %v437 = vld [vmem:[%s4 + $0x28] sm:$0x1]
    %v438 = vld [vmem:[%s4 + $0x30] sm:$0x1]
    %v439 = vsel %vm436, 1, 0
    %440 = vset.pattern.permute.xlu0 0
    %441 = vperm.xlu0 %440, %v439
    %v442 = vpop.permute.xlu0 %441
    %vm443 = vcmp.eq.s32.totalorder %v442, 1
    %v444 = vlaneseq
    %v445 = vshrl.u32 %v444, 7
    %v446 = vsub.s32 0, %v445
    %v447 = vrot.slane %v437, %v446
    %v448 = vlaneseq
    %v449 = vshrl.u32 %v448, 7
    %v450 = vsub.s32 0, %v449
    %v451 = vrot.slane %v438, %v450
    %v452 = vsel %vm443, %v447, %v451
    %v453 = vadd.f32 %v434, %v452
    %vm454 = vcmp.eq.f32.partialorder %v435, -1.0
    %v455 = vld [vmem:[%s4 + $0x20] sm:$0x1]
    %v456 = vsel %vm454, 1, 0
    %457 = vset.pattern.permute.xlu0 0
    %458 = vperm.xlu0 %457, %v456
    %v459 = vpop.permute.xlu0 %458
    %vm460 = vcmp.eq.s32.totalorder %v459, 1
    %v461 = vlaneseq
    %v462 = vshrl.u32 %v461, 7
    %v463 = vsub.s32 0, %v462
    %v464 = vrot.slane %v455, %v463
    %v465 = vsel %vm460, %v464, %v453
    %v466 = vld [vmem:[%s4 + $0x38] sm:$0xff]
    %v467 = vld [vmem:[%s3 + $0x50] sm:$0xf]
    %v468 = vpack.c.bf16 %v465, %v465
    %vm469 = vcmask 23552
    %v471 = vsel %vm469, %v467, 0
    %vm473 = vcmask 1041408
    %v474 = vsel %vm280, 4294967295, 65535
    %v475 = vsel %vm473, %v474, 0
    %v477 = vand.u32 %v468, %v475
    %479 = vmatprep.subr.bf16.mxu0 0
    %480 = vmatpush1.bf16.msra.mxu0 0
    %481 = vmatprep.subr.bf16.mxu0 0
    %482 = vmatpush1.bf16.msra.mxu0 0
    %483 = vmatprep.subr.bf16.mxu0 0
    %484 = vmatpush1.bf16.msra.mxu0 0
    %485 = vmatprep.subr.bf16.mxu0 0
    %486 = vmatpush1.bf16.msra.mxu0 0
    %487 = vmatprep.subr.bf16.mxu0 0
    %488 = vmatpush1.bf16.msra.mxu0 0
    %489 = vmatprep.subr.bf16.mxu0 0
    %490 = vmatpush1.bf16.msra.mxu0 0
    %491 = vmatprep.subr.bf16.mxu0 0
    %492 = vmatpush1.bf16.msra.mxu0 0
    %493 = vmatprep.subr.bf16.mxu0 0
    %494 = vmatpush1.bf16.msra.mxu0 %v477
    %495 = vmatprep.subr.bf16.mxu0 0
    %496 = vmatpush2.bf16.msra.mxu0 0
    %497 = vmatprep.subr.bf16.mxu0 0
    %498 = vmatpush2.bf16.msra.mxu0 0
    %499 = vmatprep.subr.bf16.mxu0 0
    %500 = vmatpush2.bf16.msra.mxu0 0
    %501 = vmatprep.subr.bf16.mxu0 0
    %502 = vmatpush2.bf16.msra.mxu0 0
    %503 = vmatprep.subr.bf16.mxu0 0
    %504 = vmatpush2.bf16.msra.mxu0 0
    %505 = vmatprep.subr.bf16.mxu0 0
    %506 = vmatpush2.bf16.msra.mxu0 0
    %507 = vmatprep.subr.bf16.mxu0 0
    %508 = vmatpush2.bf16.msra.mxu0 0
    %509 = vmatprep.subr.bf16.mxu0 0
    %510 = vmatpush2.bf16.msra.mxu0 0
    %511 = vmatprep.mubr.bf16.mxu0 0
    %512 = vmatmul.mubr.bf16.gmra.mxu0 %v471
    %v513 = vpop.f32.mrf.mxu0
    %v514 = vadd.f32 0.0, %v513
    %v515 = vpop.f32.mrf.mxu0
    %v516 = vpop.f32.mrf.mxu0
    %v517 = vpop.f32.mrf.mxu0
    %518 = vdwg.mxu0
    %v519 = vadd.f32 %v466, %v514
    %v520 = vld [vmem:[%s3 + $0x58] sm:$0xf]
    %v521 = vld [vmem:[%s3 + $0x5c] sm:$0xf]
    %v522 = vld [vmem:[%s3 + $0x60] sm:$0xf]
    %v523 = vld [vmem:[%s3 + $0x64] sm:$0xf]
    %v524 = vpack.c.bf16 %v519, %v519
    %v525 = vld [vmem:[%s4 + $0x40] sm:$0x1]
    %v526 = vlaneseq
    %v527 = vshrl.u32 %v526, 7
    %v528 = vsub.s32 0, %v527
    %v529 = vrot.slane %v525, %v528
    %v534 = vunpack.c.l.b16 %v520
    %v535 = vunpack.c.l.b16 %v521
    %v536 = vunpack.c.l.b16 %v522
    %v537 = vunpack.c.l.b16 %v523
    %v538 = vpack.c.b16 %v535, %v534
    %v539 = vpack.c.b16 %v537, %v536
    %v543 = vsel %vm123, %v524, 0
    %545 = vmatprep.subr.bf16.mxu0 0
    %546 = vmatpush1.bf16.msra.mxu0 0
    %547 = vmatprep.subr.bf16.mxu0 0
    %548 = vmatpush1.bf16.msra.mxu0 0
    %549 = vmatprep.subr.bf16.mxu0 0
    %550 = vmatpush1.bf16.msra.mxu0 0
    %551 = vmatprep.subr.bf16.mxu0 0
    %552 = vmatpush1.bf16.msra.mxu0 0
    %553 = vmatprep.subr.bf16.mxu0 0
    %554 = vmatpush1.bf16.msra.mxu0 0
    %555 = vmatprep.subr.bf16.mxu0 0
    %556 = vmatpush1.bf16.msra.mxu0 0
    %557 = vmatprep.subr.bf16.mxu0 0
    %558 = vmatpush1.bf16.msra.mxu0 %v539
    %559 = vmatprep.subr.bf16.mxu0 0
    %560 = vmatpush1.bf16.msra.mxu0 %v538
    %561 = vmatprep.subr.bf16.mxu0 0
    %562 = vmatpush2.bf16.msra.mxu0 0
    %563 = vmatprep.subr.bf16.mxu0 0
    %564 = vmatpush2.bf16.msra.mxu0 0
    %565 = vmatprep.subr.bf16.mxu0 0
    %566 = vmatpush2.bf16.msra.mxu0 0
    %567 = vmatprep.subr.bf16.mxu0 0
    %568 = vmatpush2.bf16.msra.mxu0 0
    %569 = vmatprep.subr.bf16.mxu0 0
    %570 = vmatpush2.bf16.msra.mxu0 0
    %571 = vmatprep.subr.bf16.mxu0 0
    %572 = vmatpush2.bf16.msra.mxu0 0
    %573 = vmatprep.subr.bf16.mxu0 0
    %574 = vmatpush2.bf16.msra.mxu0 0
    %575 = vmatprep.subr.bf16.mxu0 0
    %576 = vmatpush2.bf16.msra.mxu0 0
    %577 = vmatprep.mubr.bf16.mxu0 0
    %578 = vmatmul.mubr.bf16.gmra.mxu0 %v543
    %v579 = vpop.f32.mrf.mxu0
    %v580 = vadd.f32 %v529, %v579
    %v581 = vpop.f32.mrf.mxu0
    %v582 = vpop.f32.mrf.mxu0
    %v583 = vpop.f32.mrf.mxu0
    %584 = vdwg.mxu0
    %v585 = vld [vmem:[%s3 + $0x68] sm:$0xf]
    %v586 = vld [vmem:[%s3 + $0x6c] sm:$0xf]
    %v587 = vld [vmem:[%s3 + $0x70] sm:$0xf]
    %v588 = vld [vmem:[%s3 + $0x74] sm:$0xf]
    %v589 = vpack.c.bf16 %v272, %v271
    %v590 = vld [vmem:[%s4 + $0x48] sm:$0xff]
    %v591 = vld [vmem:[%s4 + $0x50] sm:$0xff]
    %v596 = vunpack.c.l.b16 %v585
    %v597 = vunpack.c.l.b16 %v586
    %v598 = vunpack.c.l.b16 %v587
    %v599 = vunpack.c.l.b16 %v588
    %v600 = vpack.c.b16 %v597, %v596
    %v601 = vpack.c.b16 %v599, %v598
    %v605 = vsel %vm123, %v589, 0
    %607 = vmatprep.subr.bf16.mxu0 0
    %608 = vmatpush1.bf16.msra.mxu0 0
    %609 = vmatprep.subr.bf16.mxu0 0
    %610 = vmatpush1.bf16.msra.mxu0 0
    %611 = vmatprep.subr.bf16.mxu0 0
    %612 = vmatpush1.bf16.msra.mxu0 0
    %613 = vmatprep.subr.bf16.mxu0 0
    %614 = vmatpush1.bf16.msra.mxu0 0
    %615 = vmatprep.subr.bf16.mxu0 0
    %616 = vmatpush1.bf16.msra.mxu0 0
    %617 = vmatprep.subr.bf16.mxu0 0
    %618 = vmatpush1.bf16.msra.mxu0 0
    %619 = vmatprep.subr.bf16.mxu0 0
    %620 = vmatpush1.bf16.msra.mxu0 %v601
    %621 = vmatprep.subr.bf16.mxu0 0
    %622 = vmatpush1.bf16.msra.mxu0 %v600
    %623 = vmatprep.subr.bf16.mxu0 0
    %624 = vmatpush2.bf16.msra.mxu0 0
    %625 = vmatprep.subr.bf16.mxu0 0
    %626 = vmatpush2.bf16.msra.mxu0 0
    %627 = vmatprep.subr.bf16.mxu0 0
    %628 = vmatpush2.bf16.msra.mxu0 0
    %629 = vmatprep.subr.bf16.mxu0 0
    %630 = vmatpush2.bf16.msra.mxu0 0
    %631 = vmatprep.subr.bf16.mxu0 0
    %632 = vmatpush2.bf16.msra.mxu0 0
    %633 = vmatprep.subr.bf16.mxu0 0
    %634 = vmatpush2.bf16.msra.mxu0 0
    %635 = vmatprep.subr.bf16.mxu0 0
    %636 = vmatpush2.bf16.msra.mxu0 0
    %637 = vmatprep.subr.bf16.mxu0 0
    %638 = vmatpush2.bf16.msra.mxu0 0
    %639 = vmatprep.mubr.bf16.mxu0 0
    %640 = vmatmul.mubr.bf16.gmra.mxu0 %v605
    %v641 = vpop.f32.mrf.mxu0
    %v642 = vadd.f32 %v590, %v641
    %v643 = vpop.f32.mrf.mxu0
    %v644 = vpop.f32.mrf.mxu0
    %v645 = vadd.f32 %v591, %v644
    %v646 = vpop.f32.mrf.mxu0
    %647 = vdwg.mxu0
    %v648 = vpack.c.bf16 %v580, %v580
    %v649 = vpack.c.bf16 %v645, %v642
    %v651 = vsel %vm219, %v648, 0
    %v654 = vsel %vm219, %v649, 0
    %656 = vmatprep.subr.bf16.mxu0 0
    %657 = vmatpush1.bf16.xpose.msra.mxu0 0
    %658 = vmatprep.subr.bf16.mxu0 0
    %659 = vmatpush1.bf16.xpose.msra.mxu0 0
    %660 = vmatprep.subr.bf16.mxu0 0
    %661 = vmatpush1.bf16.xpose.msra.mxu0 0
    %662 = vmatprep.subr.bf16.mxu0 0
    %663 = vmatpush1.bf16.xpose.msra.mxu0 0
    %664 = vmatprep.subr.bf16.mxu0 0
    %665 = vmatpush1.bf16.xpose.msra.mxu0 0
    %666 = vmatprep.subr.bf16.mxu0 0
    %667 = vmatpush1.bf16.xpose.msra.mxu0 0
    %668 = vmatprep.subr.bf16.mxu0 0
    %669 = vmatpush1.bf16.xpose.msra.mxu0 0
    %670 = vmatprep.subr.bf16.mxu0 0
    %671 = vmatpush1.bf16.xpose.msra.mxu0 %v654
    %672 = vmatprep.subr.bf16.mxu0 0
    %673 = vmatpush2.bf16.xpose.msra.mxu0 0
    %674 = vmatprep.subr.bf16.mxu0 0
    %675 = vmatpush2.bf16.xpose.msra.mxu0 0
    %676 = vmatprep.subr.bf16.mxu0 0
    %677 = vmatpush2.bf16.xpose.msra.mxu0 0
    %678 = vmatprep.subr.bf16.mxu0 0
    %679 = vmatpush2.bf16.xpose.msra.mxu0 0
    %680 = vmatprep.subr.bf16.mxu0 0
    %681 = vmatpush2.bf16.xpose.msra.mxu0 0
    %682 = vmatprep.subr.bf16.mxu0 0
    %683 = vmatpush2.bf16.xpose.msra.mxu0 0
    %684 = vmatprep.subr.bf16.mxu0 0
    %685 = vmatpush2.bf16.xpose.msra.mxu0 0
    %686 = vmatprep.subr.bf16.mxu0 0
    %687 = vmatpush2.bf16.xpose.msra.mxu0 0
    %688 = vmatprep.mubr.bf16.mxu0 0
    %689 = vmatmul.mubr.bf16.gmra.mxu0 %v651
    %v690 = vpop.f32.mrf.mxu0
    %v691 = vadd.f32 0.0, %v690
    %v692 = vpop.f32.mrf.mxu0
    %v693 = vpop.f32.mrf.mxu0
    %v694 = vpop.f32.mrf.mxu0
    %695 = vdwg.mxu0
    %v696 = vmul.f32 %v691, 0.17677669
    %vm697 = vcmask 130048
    %v698 = vsel %vm697, %v696, -inf
    %699 = vmax.xlane.f32.xlu0 %v698
    %v700 = vpop.xlane.xlu0 %699
    %v701 = vsub.f32 %v696, %v700
    %v702 = vmul.f32 %v701, 1.442695
    %v703 = vpow.pop %v702
    %v704 = vsel %vm697, %v703, 0.0
    %705 = vadd.xlane.f32.xlu0 %v704
    %v706 = vpop.xlane.xlu0 %705
    %v707 = vrcp.pop %v706
    %v708 = vmul.f32 %v703, %v707
    %v709 = vpack.c.bf16 %v708, %v708
    %v711 = vsel %vm697, %v709, 0
    %713 = vmatprep.subr.bf16.mxu0 0
    %714 = vmatpush1.bf16.msra.mxu0 0
    %715 = vmatprep.subr.bf16.mxu0 0
    %716 = vmatpush1.bf16.msra.mxu0 0
    %717 = vmatprep.subr.bf16.mxu0 0
    %718 = vmatpush1.bf16.msra.mxu0 0
    %719 = vmatprep.subr.bf16.mxu0 0
    %720 = vmatpush1.bf16.msra.mxu0 0
    %721 = vmatprep.subr.bf16.mxu0 0
    %722 = vmatpush1.bf16.msra.mxu0 0
    %723 = vmatprep.subr.bf16.mxu0 0
    %724 = vmatpush1.bf16.msra.mxu0 0
    %725 = vmatprep.subr.bf16.mxu0 0
    %726 = vmatpush1.bf16.msra.mxu0 0
    %727 = vmatprep.subr.bf16.mxu0 0
    %728 = vmatpush1.bf16.msra.mxu0 %v649
    %729 = vmatprep.subr.bf16.mxu0 0
    %730 = vmatpush2.bf16.msra.mxu0 0
    %731 = vmatprep.subr.bf16.mxu0 0
    %732 = vmatpush2.bf16.msra.mxu0 0
    %733 = vmatprep.subr.bf16.mxu0 0
    %734 = vmatpush2.bf16.msra.mxu0 0
    %735 = vmatprep.subr.bf16.mxu0 0
    %736 = vmatpush2.bf16.msra.mxu0 0
    %737 = vmatprep.subr.bf16.mxu0 0
    %738 = vmatpush2.bf16.msra.mxu0 0
    %739 = vmatprep.subr.bf16.mxu0 0
    %740 = vmatpush2.bf16.msra.mxu0 0
    %741 = vmatprep.subr.bf16.mxu0 0
    %742 = vmatpush2.bf16.msra.mxu0 0
    %743 = vmatprep.subr.bf16.mxu0 0
    %744 = vmatpush2.bf16.msra.mxu0 0
    %745 = vmatprep.mubr.bf16.mxu0 0
    %746 = vmatmul.mubr.bf16.gmra.mxu0 %v711
    %v747 = vpop.f32.mrf.mxu0
    %v748 = vadd.f32 0.0, %v747
    %v749 = vpop.f32.mrf.mxu0
    %v750 = vpop.f32.mrf.mxu0
    %v751 = vpop.f32.mrf.mxu0
    %752 = vdwg.mxu0
    %v753 = vld [vmem:[%s3 + $0x78] sm:$0xf]
    %v754 = vld [vmem:[%s3 + $0x7c] sm:$0xf]
    %v755 = vld [vmem:[%s3 + $0x80] sm:$0xf]
    %v756 = vld [vmem:[%s3 + $0x84] sm:$0xf]
    %v757 = vld [vmem:[%s3 + $0x88] sm:$0xf]
    %v758 = vld [vmem:[%s3 + $0x8c] sm:$0xf]
    %v759 = vld [vmem:[%s3 + $0x90] sm:$0xf]
    %v760 = vld [vmem:[%s3 + $0x94] sm:$0xf]
    %v761 = vpack.c.bf16 %v748, %v748
    %v770 = vunpack.c.l.b16 %v753
    %v771 = vunpack.c.l.b16 %v754
    %v772 = vunpack.c.l.b16 %v755
    %v773 = vunpack.c.l.b16 %v756
    %v774 = vunpack.c.l.b16 %v757
    %v775 = vunpack.c.l.b16 %v758
    %v776 = vunpack.c.l.b16 %v759
    %v777 = vunpack.c.l.b16 %v760
    %v778 = vpack.c.b16 %v771, %v770
    %v779 = vpack.c.b16 %v773, %v772
    %v780 = vpack.c.b16 %v775, %v774
    %v781 = vpack.c.b16 %v777, %v776
    %v787 = vsel %vm219, %v761, 0
    %789 = vmatprep.subr.bf16.mxu0 0
    %790 = vmatpush1.bf16.msra.mxu0 0
    %791 = vmatprep.subr.bf16.mxu0 0
    %792 = vmatpush1.bf16.msra.mxu0 0
    %793 = vmatprep.subr.bf16.mxu0 0
    %794 = vmatpush1.bf16.msra.mxu0 0
    %795 = vmatprep.subr.bf16.mxu0 0
    %796 = vmatpush1.bf16.msra.mxu0 0
    %797 = vmatprep.subr.bf16.mxu0 0
    %798 = vmatpush1.bf16.msra.mxu0 %v781
    %799 = vmatprep.subr.bf16.mxu0 0
    %800 = vmatpush1.bf16.msra.mxu0 %v780
    %801 = vmatprep.subr.bf16.mxu0 0
    %802 = vmatpush1.bf16.msra.mxu0 %v779
    %803 = vmatprep.subr.bf16.mxu0 0
    %804 = vmatpush1.bf16.msra.mxu0 %v778
    %805 = vmatprep.subr.bf16.mxu0 0
    %806 = vmatpush2.bf16.msra.mxu0 0
    %807 = vmatprep.subr.bf16.mxu0 0
    %808 = vmatpush2.bf16.msra.mxu0 0
    %809 = vmatprep.subr.bf16.mxu0 0
    %810 = vmatpush2.bf16.msra.mxu0 0
    %811 = vmatprep.subr.bf16.mxu0 0
    %812 = vmatpush2.bf16.msra.mxu0 0
    %813 = vmatprep.subr.bf16.mxu0 0
    %814 = vmatpush2.bf16.msra.mxu0 0
    %815 = vmatprep.subr.bf16.mxu0 0
    %816 = vmatpush2.bf16.msra.mxu0 0
    %817 = vmatprep.subr.bf16.mxu0 0
    %818 = vmatpush2.bf16.msra.mxu0 0
    %819 = vmatprep.subr.bf16.mxu0 0
    %820 = vmatpush2.bf16.msra.mxu0 0
    %821 = vmatprep.mubr.bf16.mxu0 0
    %822 = vmatmul.mubr.bf16.gmra.mxu0 %v787
    %v823 = vpop.f32.mrf.mxu0
    %v824 = vadd.f32 0.0, %v823
    %v825 = vpop.f32.mrf.mxu0
    %v826 = vpop.f32.mrf.mxu0
    %v827 = vpop.f32.mrf.mxu0
    %828 = vdwg.mxu0
    %v829 = vadd.f32 %v519, %v824
    %v830 = vld [vmem:[%s4 + $0x58] sm:$0x1]
    %v831 = vlaneseq
    %v832 = vshrl.u32 %v831, 7
    %v833 = vsub.s32 0, %v832
    %v834 = vrot.slane %v830, %v833
    %v835 = vadd.f32 %v829, %v834
    %v836 = vld [vmem:[%s3 + $0x98] sm:$0xf]
    %v837 = vld [vmem:[%s3 + $0x9c] sm:$0xf]
    %v838 = vld [vmem:[%s3 + $0xa0] sm:$0xf]
    %v839 = vld [vmem:[%s3 + $0xa4] sm:$0xf]
    %v840 = vpack.c.bf16 %v835, %v835
    %v841 = vld [vmem:[%s4 + $0x60] sm:$0x1]
    %v842 = vlaneseq
    %v843 = vshrl.u32 %v842, 7
    %v844 = vsub.s32 0, %v843
    %v845 = vrot.slane %v841, %v844
    %v850 = vunpack.c.l.b16 %v836
    %v851 = vunpack.c.l.b16 %v837
    %v852 = vunpack.c.l.b16 %v838
    %v853 = vunpack.c.l.b16 %v839
    %v854 = vpack.c.b16 %v851, %v850
    %v855 = vpack.c.b16 %v853, %v852
    %v859 = vsel %vm123, %v840, 0
    %861 = vmatprep.subr.bf16.mxu0 0
    %862 = vmatpush1.bf16.msra.mxu0 0
    %863 = vmatprep.subr.bf16.mxu0 0
    %864 = vmatpush1.bf16.msra.mxu0 0
    %865 = vmatprep.subr.bf16.mxu0 0
    %866 = vmatpush1.bf16.msra.mxu0 0
    %867 = vmatprep.subr.bf16.mxu0 0
    %868 = vmatpush1.bf16.msra.mxu0 0
    %869 = vmatprep.subr.bf16.mxu0 0
    %870 = vmatpush1.bf16.msra.mxu0 0
    %871 = vmatprep.subr.bf16.mxu0 0
    %872 = vmatpush1.bf16.msra.mxu0 0
    %873 = vmatprep.subr.bf16.mxu0 0
    %874 = vmatpush1.bf16.msra.mxu0 %v855
    %875 = vmatprep.subr.bf16.mxu0 0
    %876 = vmatpush1.bf16.msra.mxu0 %v854
    %877 = vmatprep.subr.bf16.mxu0 0
    %878 = vmatpush2.bf16.msra.mxu0 0
    %879 = vmatprep.subr.bf16.mxu0 0
    %880 = vmatpush2.bf16.msra.mxu0 0
    %881 = vmatprep.subr.bf16.mxu0 0
    %882 = vmatpush2.bf16.msra.mxu0 0
    %883 = vmatprep.subr.bf16.mxu0 0
    %884 = vmatpush2.bf16.msra.mxu0 0
    %885 = vmatprep.subr.bf16.mxu0 0
    %886 = vmatpush2.bf16.msra.mxu0 0
    %887 = vmatprep.subr.bf16.mxu0 0
    %888 = vmatpush2.bf16.msra.mxu0 0
    %889 = vmatprep.subr.bf16.mxu0 0
    %890 = vmatpush2.bf16.msra.mxu0 0
    %891 = vmatprep.subr.bf16.mxu0 0
    %892 = vmatpush2.bf16.msra.mxu0 0
    %893 = vmatprep.mubr.bf16.mxu0 0
    %894 = vmatmul.mubr.bf16.gmra.mxu0 %v859
    %v895 = vpop.f32.mrf.mxu0
    %v896 = vadd.f32 %v845, %v895
    %v897 = vpop.f32.mrf.mxu0
    %v898 = vpop.f32.mrf.mxu0
    %v899 = vpop.f32.mrf.mxu0
    %900 = vdwg.mxu0
    %v901 = vmul.f32 %v896, %v896
    %v902 = vmul.f32 %v896, %v901
    %v903 = vmul.f32 %v902, 0.044715
    %v904 = vadd.f32 %v896, %v903
    %v905 = vmul.f32 %v904, 0.7978846
    %v906 = vtanh.pop %v905
    %v907 = vadd.f32 %v906, 1.0
    %v908 = vmul.f32 %v907, 0.5
    %v909 = vmul.f32 %v896, %v908
    %v910 = vld [vmem:[%s3 + $0xa8] sm:$0xf]
    %v911 = vld [vmem:[%s3 + $0xac] sm:$0xf]
    %v912 = vld [vmem:[%s3 + $0xb0] sm:$0xf]
    %v913 = vld [vmem:[%s3 + $0xb4] sm:$0xf]
    %v914 = vld [vmem:[%s3 + $0xb8] sm:$0xf]
    %v915 = vld [vmem:[%s3 + $0xbc] sm:$0xf]
    %v916 = vld [vmem:[%s3 + $0xc0] sm:$0xf]
    %v917 = vld [vmem:[%s3 + $0xc4] sm:$0xf]
    %v918 = vpack.c.bf16 %v909, %v909
    %v927 = vunpack.c.l.b16 %v910
    %v928 = vunpack.c.l.b16 %v911
    %v929 = vunpack.c.l.b16 %v912
    %v930 = vunpack.c.l.b16 %v913
    %v931 = vunpack.c.l.b16 %v914
    %v932 = vunpack.c.l.b16 %v915
    %v933 = vunpack.c.l.b16 %v916
    %v934 = vunpack.c.l.b16 %v917
    %v935 = vpack.c.b16 %v928, %v927
    %v936 = vpack.c.b16 %v930, %v929
    %v937 = vpack.c.b16 %v932, %v931
    %v938 = vpack.c.b16 %v934, %v933
    %v944 = vsel %vm219, %v918, 0
    %946 = vmatprep.subr.bf16.mxu0 0
    %947 = vmatpush1.bf16.msra.mxu0 0
    %948 = vmatprep.subr.bf16.mxu0 0
    %949 = vmatpush1.bf16.msra.mxu0 0
    %950 = vmatprep.subr.bf16.mxu0 0
    %951 = vmatpush1.bf16.msra.mxu0 0
    %952 = vmatprep.subr.bf16.mxu0 0
    %953 = vmatpush1.bf16.msra.mxu0 0
    %954 = vmatprep.subr.bf16.mxu0 0
    %955 = vmatpush1.bf16.msra.mxu0 %v938
    %956 = vmatprep.subr.bf16.mxu0 0
    %957 = vmatpush1.bf16.msra.mxu0 %v937
    %958 = vmatprep.subr.bf16.mxu0 0
    %959 = vmatpush1.bf16.msra.mxu0 %v936
    %960 = vmatprep.subr.bf16.mxu0 0
    %961 = vmatpush1.bf16.msra.mxu0 %v935
    %962 = vmatprep.subr.bf16.mxu0 0
    %963 = vmatpush2.bf16.msra.mxu0 0
    %964 = vmatprep.subr.bf16.mxu0 0
    %965 = vmatpush2.bf16.msra.mxu0 0
    %966 = vmatprep.subr.bf16.mxu0 0
    %967 = vmatpush2.bf16.msra.mxu0 0
    %968 = vmatprep.subr.bf16.mxu0 0
    %969 = vmatpush2.bf16.msra.mxu0 0
    %970 = vmatprep.subr.bf16.mxu0 0
    %971 = vmatpush2.bf16.msra.mxu0 0
    %972 = vmatprep.subr.bf16.mxu0 0
    %973 = vmatpush2.bf16.msra.mxu0 0
    %974 = vmatprep.subr.bf16.mxu0 0
    %975 = vmatpush2.bf16.msra.mxu0 0
    %976 = vmatprep.subr.bf16.mxu0 0
    %977 = vmatpush2.bf16.msra.mxu0 0
    %978 = vmatprep.mubr.bf16.mxu0 0
    %979 = vmatmul.mubr.bf16.gmra.mxu0 %v944
    %v980 = vpop.f32.mrf.mxu0
    %v981 = vadd.f32 0.0, %v980
    %v982 = vpop.f32.mrf.mxu0
    %v983 = vpop.f32.mrf.mxu0
    %v984 = vpop.f32.mrf.mxu0
    %985 = vdwg.mxu0
    %v986 = vadd.f32 %v835, %v981
    %v987 = vld [vmem:[%s4 + $0x68] sm:$0x1]
    %v988 = vlaneseq
    %v989 = vshrl.u32 %v988, 7
    %v990 = vsub.s32 0, %v989
    %v991 = vrot.slane %v987, %v990
    %v992 = vadd.f32 %v986, %v991
    %v993 = vld [vmem:[%s3 + $0xc8] sm:$0xf]
    %v994 = vld [vmem:[%s3 + $0xcc] sm:$0xf]
    %v995 = vld [vmem:[%s3 + $0xd0] sm:$0xf]
    %v996 = vld [vmem:[%s3 + $0xd4] sm:$0xf]
    %v997 = vpack.c.bf16 %v992, %v992
    %v998 = vld [vmem:[%s4 + $0x70] sm:$0x1]
    %v999 = vlaneseq
    %v1000 = vshrl.u32 %v999, 7
    %v1001 = vsub.s32 0, %v1000
    %v1002 = vrot.slane %v998, %v1001
    %v1004 = vshrl.u32 %v997, 16
    %v1006 = vshll.u32 %v997, 16
    %v1008 = vrot.slane %v1006, 1
    %v1009 = vor.u32 %v1004, %v1008
    %v1014 = vunpack.c.l.b16 %v993
    %v1015 = vunpack.c.l.b16 %v994
    %v1016 = vunpack.c.l.b16 %v995
    %v1017 = vunpack.c.l.b16 %v996
    %v1018 = vpack.c.b16 %v1015, %v1014
    %v1019 = vpack.c.b16 %v1017, %v1016
    %v1023 = vsel %vm123, %v1009, 0
    %1025 = vmatprep.subr.bf16.mxu0 0
    %1026 = vmatpush1.bf16.msra.mxu0 0
    %1027 = vmatprep.subr.bf16.mxu0 0
    %1028 = vmatpush1.bf16.msra.mxu0 0
    %1029 = vmatprep.subr.bf16.mxu0 0
    %1030 = vmatpush1.bf16.msra.mxu0 0
    %1031 = vmatprep.subr.bf16.mxu0 0
    %1032 = vmatpush1.bf16.msra.mxu0 0
    %1033 = vmatprep.subr.bf16.mxu0 0
    %1034 = vmatpush1.bf16.msra.mxu0 0
    %1035 = vmatprep.subr.bf16.mxu0 0
    %1036 = vmatpush1.bf16.msra.mxu0 0
    %1037 = vmatprep.subr.bf16.mxu0 0
    %1038 = vmatpush1.bf16.msra.mxu0 %v1019
    %1039 = vmatprep.subr.bf16.mxu0 0
    %1040 = vmatpush1.bf16.msra.mxu0 %v1018
    %1041 = vmatprep.subr.bf16.mxu0 0
    %1042 = vmatpush2.bf16.msra.mxu0 0
    %1043 = vmatprep.subr.bf16.mxu0 0
    %1044 = vmatpush2.bf16.msra.mxu0 0
    %1045 = vmatprep.subr.bf16.mxu0 0
    %1046 = vmatpush2.bf16.msra.mxu0 0
    %1047 = vmatprep.subr.bf16.mxu0 0
    %1048 = vmatpush2.bf16.msra.mxu0 0
    %1049 = vmatprep.subr.bf16.mxu0 0
    %1050 = vmatpush2.bf16.msra.mxu0 0
    %1051 = vmatprep.subr.bf16.mxu0 0
    %1052 = vmatpush2.bf16.msra.mxu0 0
    %1053 = vmatprep.subr.bf16.mxu0 0
    %1054 = vmatpush2.bf16.msra.mxu0 0
    %1055 = vmatprep.subr.bf16.mxu0 0
    %1056 = vmatpush2.bf16.msra.mxu0 0
    %1057 = vmatprep.mubr.bf16.mxu0 0
    %1058 = vmatmul.mubr.bf16.gmra.mxu0 %v1023
    %v1059 = vpop.f32.mrf.mxu0
    %v1060 = vadd.f32 %v1002, %v1059
    %v1061 = vpop.f32.mrf.mxu0
    %v1062 = vpop.f32.mrf.mxu0
    %v1063 = vpop.f32.mrf.mxu0
    %1064 = vdwg.mxu0
    %v1065 = vld [vmem:[%s3 + $0xd8] sm:$0xf]
    %v1066 = vld [vmem:[%s3 + $0xdc] sm:$0xf]
    %v1067 = vld [vmem:[%s3 + $0xe0] sm:$0xf]
    %v1068 = vld [vmem:[%s3 + $0xe4] sm:$0xf]
    %v1069 = vld [vmem:[%s4 + $0x78] sm:$0x1]
    %v1070 = vlaneseq
    %v1071 = vshrl.u32 %v1070, 7
    %v1072 = vsub.s32 0, %v1071
    %v1073 = vrot.slane %v1069, %v1072
    %v1078 = vunpack.c.l.b16 %v1065
    %v1079 = vunpack.c.l.b16 %v1066
    %v1080 = vunpack.c.l.b16 %v1067
    %v1081 = vunpack.c.l.b16 %v1068
    %v1082 = vpack.c.b16 %v1079, %v1078
    %v1083 = vpack.c.b16 %v1081, %v1080
    %1086 = vmatprep.subr.bf16.mxu0 0
    %1087 = vmatpush1.bf16.msra.mxu0 0
    %1088 = vmatprep.subr.bf16.mxu0 0
    %1089 = vmatpush1.bf16.msra.mxu0 0
    %1090 = vmatprep.subr.bf16.mxu0 0
    %1091 = vmatpush1.bf16.msra.mxu0 0
    %1092 = vmatprep.subr.bf16.mxu0 0
    %1093 = vmatpush1.bf16.msra.mxu0 0
    %1094 = vmatprep.subr.bf16.mxu0 0
    %1095 = vmatpush1.bf16.msra.mxu0 0
    %1096 = vmatprep.subr.bf16.mxu0 0
    %1097 = vmatpush1.bf16.msra.mxu0 0
    %1098 = vmatprep.subr.bf16.mxu0 0
    %1099 = vmatpush1.bf16.msra.mxu0 %v1083
    %1100 = vmatprep.subr.bf16.mxu0 0
    %1101 = vmatpush1.bf16.msra.mxu0 %v1082
    %1102 = vmatprep.subr.bf16.mxu0 0
    %1103 = vmatpush2.bf16.msra.mxu0 0
    %1104 = vmatprep.subr.bf16.mxu0 0
    %1105 = vmatpush2.bf16.msra.mxu0 0
    %1106 = vmatprep.subr.bf16.mxu0 0
    %1107 = vmatpush2.bf16.msra.mxu0 0
    %1108 = vmatprep.subr.bf16.mxu0 0
    %1109 = vmatpush2.bf16.msra.mxu0 0
    %1110 = vmatprep.subr.bf16.mxu0 0
    %1111 = vmatpush2.bf16.msra.mxu0 0
    %1112 = vmatprep.subr.bf16.mxu0 0
    %1113 = vmatpush2.bf16.msra.mxu0 0
    %1114 = vmatprep.subr.bf16.mxu0 0
    %1115 = vmatpush2.bf16.msra.mxu0 0
    %1116 = vmatprep.subr.bf16.mxu0 0
    %1117 = vmatpush2.bf16.msra.mxu0 0
    %1118 = vmatprep.mubr.bf16.mxu0 0
    %1119 = vmatmul.mubr.bf16.gmra.mxu0 %v605
    %v1120 = vpop.f32.mrf.mxu0
    %v1121 = vadd.f32 %v1073, %v1120
    %v1122 = vpop.f32.mrf.mxu0
    %v1123 = vpop.f32.mrf.mxu0
    %v1124 = vadd.f32 %v1073, %v1123
    %v1125 = vpop.f32.mrf.mxu0
    %1126 = vdwg.mxu0
    %v1127 = vld [vmem:[%s3 + $0xe8] sm:$0xf]
    %v1128 = vld [vmem:[%s3 + $0xec] sm:$0xf]
    %v1129 = vld [vmem:[%s3 + $0xf0] sm:$0xf]
    %v1130 = vld [vmem:[%s3 + $0xf4] sm:$0xf]
    %v1131 = vld [vmem:[%s4 + $0x80] sm:$0x1]
    %v1136 = vunpack.c.l.b16 %v1127
    %v1137 = vunpack.c.l.b16 %v1128
    %v1138 = vunpack.c.l.b16 %v1129
    %v1139 = vunpack.c.l.b16 %v1130
    %v1140 = vpack.c.b16 %v1137, %v1136
    %v1141 = vpack.c.b16 %v1139, %v1138
    %v1144 = vsel %vm123, %v997, 0
    %1146 = vmatprep.subr.bf16.mxu0 0
    %1147 = vmatpush1.bf16.msra.mxu0 0
    %1148 = vmatprep.subr.bf16.mxu0 0
    %1149 = vmatpush1.bf16.msra.mxu0 0
    %1150 = vmatprep.subr.bf16.mxu0 0
    %1151 = vmatpush1.bf16.msra.mxu0 0
    %1152 = vmatprep.subr.bf16.mxu0 0
    %1153 = vmatpush1.bf16.msra.mxu0 0
    %1154 = vmatprep.subr.bf16.mxu0 0
    %1155 = vmatpush1.bf16.msra.mxu0 0
    %1156 = vmatprep.subr.bf16.mxu0 0
    %1157 = vmatpush1.bf16.msra.mxu0 0
    %1158 = vmatprep.subr.bf16.mxu0 0
    %1159 = vmatpush1.bf16.msra.mxu0 %v1141
    %1160 = vmatprep.subr.bf16.mxu0 0
    %1161 = vmatpush1.bf16.msra.mxu0 %v1140
    %1162 = vmatprep.subr.bf16.mxu0 0
    %1163 = vmatpush2.bf16.msra.mxu0 0
    %1164 = vmatprep.subr.bf16.mxu0 0
    %1165 = vmatpush2.bf16.msra.mxu0 0
    %1166 = vmatprep.subr.bf16.mxu0 0
    %1167 = vmatpush2.bf16.msra.mxu0 0
    %1168 = vmatprep.subr.bf16.mxu0 0
    %1169 = vmatpush2.bf16.msra.mxu0 0
    %1170 = vmatprep.subr.bf16.mxu0 0
    %1171 = vmatpush2.bf16.msra.mxu0 0
    %1172 = vmatprep.subr.bf16.mxu0 0
    %1173 = vmatpush2.bf16.msra.mxu0 0
    %1174 = vmatprep.subr.bf16.mxu0 0
    %1175 = vmatpush2.bf16.msra.mxu0 0
    %1176 = vmatprep.subr.bf16.mxu0 0
    %1177 = vmatpush2.bf16.msra.mxu0 0
    %1178 = vmatprep.mubr.bf16.mxu0 0
    %1179 = vmatmul.mubr.bf16.gmra.mxu0 %v1144
    %v1180 = vpop.f32.mrf.mxu0
    %v1181 = vadd.f32 %v1131, %v1180
    %v1182 = vpop.f32.mrf.mxu0
    %v1183 = vpop.f32.mrf.mxu0
    %v1184 = vpop.f32.mrf.mxu0
    %1185 = vdwg.mxu0
    %v1186 = vmul.f32 %v1181, %v1181
    %v1187 = vmul.f32 %v1181, %v1186
    %v1188 = vmul.f32 %v1187, 0.044715
    %v1189 = vadd.f32 %v1181, %v1188
    %v1190 = vmul.f32 %v1189, 0.7978846
    %v1191 = vtanh.pop %v1190
    %v1192 = vadd.f32 %v1191, 1.0
    %v1193 = vmul.f32 %v1192, 0.5
    %v1194 = vmul.f32 %v1181, %v1193
    %v1195 = vld [vmem:[%s3 + $0xf8] sm:$0xf]
    %v1196 = vld [vmem:[%s3 + $0xfc] sm:$0xf]
    %v1197 = vld [vmem:[%s3 + $0x100] sm:$0xf]
    %v1198 = vld [vmem:[%s3 + $0x104] sm:$0xf]
    %v1199 = vpack.c.bf16 %v1194, %v1194
    %v1200 = vld [vmem:[%s4 + $0x88] sm:$0x1]
    %v1205 = vunpack.c.l.b16 %v1195
    %v1206 = vunpack.c.l.b16 %v1196
    %v1207 = vunpack.c.l.b16 %v1197
    %v1208 = vunpack.c.l.b16 %v1198
    %v1209 = vpack.c.b16 %v1206, %v1205
    %v1210 = vpack.c.b16 %v1208, %v1207
    %v1214 = vsel %vm123, %v1199, 0
    %1216 = vmatprep.subr.bf16.mxu0 0
    %1217 = vmatpush1.bf16.msra.mxu0 0
    %1218 = vmatprep.subr.bf16.mxu0 0
    %1219 = vmatpush1.bf16.msra.mxu0 0
    %1220 = vmatprep.subr.bf16.mxu0 0
    %1221 = vmatpush1.bf16.msra.mxu0 0
    %1222 = vmatprep.subr.bf16.mxu0 0
    %1223 = vmatpush1.bf16.msra.mxu0 0
    %1224 = vmatprep.subr.bf16.mxu0 0
    %1225 = vmatpush1.bf16.msra.mxu0 0
    %1226 = vmatprep.subr.bf16.mxu0 0
    %1227 = vmatpush1.bf16.msra.mxu0 0
    %1228 = vmatprep.subr.bf16.mxu0 0
    %1229 = vmatpush1.bf16.msra.mxu0 %v1210
    %1230 = vmatprep.subr.bf16.mxu0 0
    %1231 = vmatpush1.bf16.msra.mxu0 %v1209
    %1232 = vmatprep.subr.bf16.mxu0 0
    %1233 = vmatpush2.bf16.msra.mxu0 0
    %1234 = vmatprep.subr.bf16.mxu0 0
    %1235 = vmatpush2.bf16.msra.mxu0 0
    %1236 = vmatprep.subr.bf16.mxu0 0
    %1237 = vmatpush2.bf16.msra.mxu0 0
    %1238 = vmatprep.subr.bf16.mxu0 0
    %1239 = vmatpush2.bf16.msra.mxu0 0
    %1240 = vmatprep.subr.bf16.mxu0 0
    %1241 = vmatpush2.bf16.msra.mxu0 0
    %1242 = vmatprep.subr.bf16.mxu0 0
    %1243 = vmatpush2.bf16.msra.mxu0 0
    %1244 = vmatprep.subr.bf16.mxu0 0
    %1245 = vmatpush2.bf16.msra.mxu0 0
    %1246 = vmatprep.subr.bf16.mxu0 0
    %1247 = vmatpush2.bf16.msra.mxu0 0
    %1248 = vmatprep.mubr.bf16.mxu0 0
    %1249 = vmatmul.mubr.bf16.gmra.mxu0 %v1214
    %v1250 = vpop.f32.mrf.mxu0
    %v1251 = vadd.f32 %v1200, %v1250
    %v1252 = vpop.f32.mrf.mxu0
    %v1253 = vpop.f32.mrf.mxu0
    %v1254 = vpop.f32.mrf.mxu0
    %1255 = vdwg.mxu0
    %v1256 = vld [vmem:[%s4 + $0x90] sm:$0x1]
    %v1257 = vadd.f32 %v1251, %v1256
    %v1258 = vlaneseq
    %v1259 = vand.u32 %v1258, 127
    %v1260 = vcvt.s32.f32 %v1259
    %vm1261 = vcmask 24576
    %v1262 = vsel %vm1261, %v1257, -inf
    %1263 = vmax.xlane.f32.xlu0 %v1262
    %v1264 = vpop.xlane.xlu0 %1263
    %vm1265 = vcmp.eq.f32.partialorder %v1257, %v1264
    %v1266 = vsel %vm1265, %v1260, 4.0
    %v1267 = vsel %vm1261, %v1266, inf
    %1268 = vmin.xlane.f32.xlu0 %v1267
    %v1269 = vpop.xlane.xlu0 %1268
    %vm1270 = vcmp.eq.f32.partialorder %v1260, %v1269
    %v1271 = vsel %vm1270, 1, 0
    %v1272 = vcvt.s32.f32 %v1271
    %v1273 = vpack.c.bf16 %v1272, %v1272
    %v1274 = vpack.c.bf16 %v1060, %v1060
    %vm1275 = vcmask 31744
    %v1277 = vsel %vm1275, %v1273, 0
    %v1280 = vsel %vm473, %v1274, 0
    %1282 = vmatprep.subr.bf16.mxu0 0
    %1283 = vmatpush1.bf16.msra.mxu0 0
    %1284 = vmatprep.subr.bf16.mxu0 0
    %1285 = vmatpush1.bf16.msra.mxu0 0
    %1286 = vmatprep.subr.bf16.mxu0 0
    %1287 = vmatpush1.bf16.msra.mxu0 0
    %1288 = vmatprep.subr.bf16.mxu0 0
    %1289 = vmatpush1.bf16.msra.mxu0 0
    %1290 = vmatprep.subr.bf16.mxu0 0
    %1291 = vmatpush1.bf16.msra.mxu0 0
    %1292 = vmatprep.subr.bf16.mxu0 0
    %1293 = vmatpush1.bf16.msra.mxu0 0
    %1294 = vmatprep.subr.bf16.mxu0 0
    %1295 = vmatpush1.bf16.msra.mxu0 0
    %1296 = vmatprep.subr.bf16.mxu0 0
    %1297 = vmatpush1.bf16.msra.mxu0 %v1280
    %1298 = vmatprep.subr.bf16.mxu0 0
    %1299 = vmatpush2.bf16.msra.mxu0 0
    %1300 = vmatprep.subr.bf16.mxu0 0
    %1301 = vmatpush2.bf16.msra.mxu0 0
    %1302 = vmatprep.subr.bf16.mxu0 0
    %1303 = vmatpush2.bf16.msra.mxu0 0
    %1304 = vmatprep.subr.bf16.mxu0 0
    %1305 = vmatpush2.bf16.msra.mxu0 0
    %1306 = vmatprep.subr.bf16.mxu0 0
    %1307 = vmatpush2.bf16.msra.mxu0 0
    %1308 = vmatprep.subr.bf16.mxu0 0
    %1309 = vmatpush2.bf16.msra.mxu0 0
    %1310 = vmatprep.subr.bf16.mxu0 0
    %1311 = vmatpush2.bf16.msra.mxu0 0
    %1312 = vmatprep.subr.bf16.mxu0 0
    %1313 = vmatpush2.bf16.msra.mxu0 0
    %1314 = vmatprep.mubr.bf16.mxu0 0
    %1315 = vmatmul.mubr.bf16.gmra.mxu0 %v1277
    %v1316 = vpop.f32.mrf.mxu0
    %v1317 = vadd.f32 0.0, %v1316
    %v1318 = vpop.f32.mrf.mxu0
    %v1319 = vpop.f32.mrf.mxu0
    %v1320 = vpop.f32.mrf.mxu0
    %1321 = vdwg.mxu0
    %v1322 = vpack.c.bf16 %v1317, %v1317
    %v1323 = vpack.c.bf16 %v1124, %v1121
    %vm1324 = vcmask 64512
    %v1326 = vsel %vm1324, %v1322, 0
    %v1329 = vsel %vm1324, %v1323, 0
    %1331 = vmatprep.subr.bf16.mxu0 0
    %1332 = vmatpush1.bf16.xpose.msra.mxu0 0
    %1333 = vmatprep.subr.bf16.mxu0 0
    %1334 = vmatpush1.bf16.xpose.msra.mxu0 0
    %1335 = vmatprep.subr.bf16.mxu0 0
    %1336 = vmatpush1.bf16.xpose.msra.mxu0 0
    %1337 = vmatprep.subr.bf16.mxu0 0
    %1338 = vmatpush1.bf16.xpose.msra.mxu0 0
    %1339 = vmatprep.subr.bf16.mxu0 0
    %1340 = vmatpush1.bf16.xpose.msra.mxu0 0
    %1341 = vmatprep.subr.bf16.mxu0 0
    %1342 = vmatpush1.bf16.xpose.msra.mxu0 0
    %1343 = vmatprep.subr.bf16.mxu0 0
    %1344 = vmatpush1.bf16.xpose.msra.mxu0 0
    %1345 = vmatprep.subr.bf16.mxu0 0
    %1346 = vmatpush1.bf16.xpose.msra.mxu0 %v1329
    %1347 = vmatprep.subr.bf16.mxu0 0
    %1348 = vmatpush2.bf16.xpose.msra.mxu0 0
    %1349 = vmatprep.subr.bf16.mxu0 0
    %1350 = vmatpush2.bf16.xpose.msra.mxu0 0
    %1351 = vmatprep.subr.bf16.mxu0 0
    %1352 = vmatpush2.bf16.xpose.msra.mxu0 0
    %1353 = vmatprep.subr.bf16.mxu0 0
    %1354 = vmatpush2.bf16.xpose.msra.mxu0 0
    %1355 = vmatprep.subr.bf16.mxu0 0
    %1356 = vmatpush2.bf16.xpose.msra.mxu0 0
    %1357 = vmatprep.subr.bf16.mxu0 0
    %1358 = vmatpush2.bf16.xpose.msra.mxu0 0
    %1359 = vmatprep.subr.bf16.mxu0 0
    %1360 = vmatpush2.bf16.xpose.msra.mxu0 0
    %1361 = vmatprep.subr.bf16.mxu0 0
    %1362 = vmatpush2.bf16.xpose.msra.mxu0 0
    %1363 = vmatprep.mubr.bf16.mxu0 0
    %1364 = vmatmul.mubr.bf16.gmra.mxu0 %v1326
    %v1365 = vpop.f32.mrf.mxu0
    %v1366 = vadd.f32 0.0, %v1365
    %v1367 = vpop.f32.mrf.mxu0
    %v1368 = vpop.f32.mrf.mxu0
    %v1369 = vpop.f32.mrf.mxu0
    %1370 = vdwg.mxu0
    %vm1371 = vcmp.gt.f32.partialorder %v1366, 0.0
    %v1372 = vsel %vm1371, 255.0, 0.0
    %vm1373 = vcmask 122880
    %1374 = vst.msk [vmem:[%s5] sm:$0x1] %vm1373, %v1372
    %v1375 = vmul.f32 %v1272, %v1251
    %v1376 = vsel %vm1261, %v1375, 0.0
    %1377 = vadd.xlane.f32.xlu0 %v1376
    %v1378 = vpop.xlane.xlu0 %1377
    %vm1379 = vcmask 0
    %1380 = vst.msk [vmem:[#allocation2] sm:$0x1] %vm1379, %v1378
    // Predicated region
    $region22: #{forward.1} parent=1 // pred_check
      _
    $region23: #{forward.1} parent=1 // pred_check_branch
      %1382 = sbr.rel (0) target = $region25
    $region24: #{forward.1} parent=1 // pred_region
      _
    $region25: #{forward.1} parent=1 // pred_fallthru
      _
    // Predicated region
    $region26: #{forward.1} parent=1 // pred_check
      _
    $region27: #{forward.1} parent=1 // pred_check_branch
      %1384 = sbr.rel (0) target = $region29
    $region28: #{forward.1} parent=1 // pred_region
      %s1386 = ssub.s32 16, 16
      %1387 = vsyncadd [#allocation3], %s1386
      %s1389 = sshll.u32 [#allocation2], 4
      %s1390 = int_to_ptr.vmem [resolvable:$true] %s1389
      %1392 = dma.vmem_to_hbm [thread:$0]  %s1390, 16, %s6, [#allocation3]
    $region29: #{forward.1} parent=1 // pred_fallthru
      _
    // Predicated region
    $region30: #{forward.1} parent=1 // pred_check
      _
    $region31: #{forward.1} parent=1 // pred_check_branch
      %1394 = sbr.rel (0) target = $region33
    $region32: #{forward.1} parent=1 // pred_region
      _
    $region33: #{forward.1} parent=1 // pred_fallthru
      _
    // Predicated region
    $region34: #{forward.1} parent=1 // pred_check
      _
    $region35: #{forward.1} parent=1 // pred_check_branch
      %1396 = sbr.rel (0) target = $region37
    $region36: #{forward.1} parent=1 // pred_region
      %1397 = dma.done [#allocation3], 16
    $region37: #{forward.1} parent=1 // pred_fallthru
      _
    %1398 = vsyncpa [#allocation3], 1

</llo_original>
